<compile_context>
chip_gen: v5e
topology: v5e:2x2
jax: 0.10.0
libtpu: 0.0.40
codegen_flags: <defaults>
</compile_context>

<pallas_src>
import jax
import jax.numpy as jnp
from jax import lax
from jax.experimental import pallas as pl
from jax.experimental.pallas import tpu as pltpu


def _critic_attention_kernel(q_ref, k_ref, m_ref, M_ref, u_ref, v_ref, s0_ref, out_ref):
    # Shapes seen by the kernel (one batch tile per grid step):
    #   q_ref: (Bt, D)   k_ref: (Bt, S, D)   m_ref: (Bt, S)
    #   M_ref: (D, D)    u_ref/v_ref: (1, D) s0_ref: (1, 1)
    #   out_ref: (1, Bt)  -- lane-dense output row
    q = q_ref[...]

    # w_b = q_b @ M + u   (single MXU matmul per tile; 1/sqrt(D) already folded into M, u)
    w = jnp.dot(q, M_ref[...], preferred_element_type=jnp.float32) + u_ref[...]   # (Bt, D)

    # c_b = q_b . v + s0  (VPU mult + cross-lane reduce)
    c = jnp.sum(q * v_ref[...], axis=-1, keepdims=True) + s0_ref[...]             # (Bt, 1)

    # dot_{b,s} = K_{b,s} . w_b + c_b   (key streamed once; bandwidth-bound part)
    kw = jnp.sum(k_ref[...] * w[:, None, :], axis=-1)                             # (Bt, S)

    # masked_fill((1-mask)==1, 0) on a binary mask == multiply by keep-mask, then sum over S.
    out = jnp.sum((kw + c) * m_ref[...], axis=-1)                                  # (Bt,)
    out_ref[...] = out[None, :]


def critic_attention(query, key, value, mask, params, *, batch_tile=128):
    """query: (B,1,D)  key: (B,S,D)  value: (B,S,D) [dead code in the original]
    mask: (B,S,1) binary  ->  state_value: (B,1)."""
    B, S, D = key.shape
    assert query.shape == (B, 1, D)
    assert mask.shape == (B, S, 1)
    del value  # Linear_v(value) is computed-then-discarded in the PyTorch forward; skip it.

    Bt = batch_tile                      # multiple of 128 -> lane-dense output stores.
    num_tiles = pl.cdiv(B, Bt)
    b_pad = num_tiles * Bt

    q2 = query.reshape(B, D).astype(jnp.float32)
    k3 = key.astype(jnp.float32)
    m2 = mask.reshape(B, S).astype(jnp.float32)
    if b_pad != B:
        pad = b_pad - B
        q2 = jnp.pad(q2, ((0, pad), (0, 0)))
        k3 = jnp.pad(k3, ((0, pad), (0, 0), (0, 0)))
        m2 = jnp.pad(m2, ((0, pad), (0, 0)))   # padded rows have mask==0 -> output 0

    # One-time weight fold (tiny: O(D^2) data, O(D^3) flops) done at full precision.
    hp = lax.Precision.HIGHEST
    inv_sqrt_d = 1.0 / (float(D) ** 0.5)
    wq = params["wq"].astype(jnp.float32)      # (D, D), nn.Linear layout (out, in)
    wk = params["wk"].astype(jnp.float32)
    bq = params["bq"].astype(jnp.float32)      # (D,)
    bk = params["bk"].astype(jnp.float32)
    M = lax.dot_general(wq, wk, (((0,), (0,)), ((), ())), precision=hp) * inv_sqrt_d  # Wq^T Wk
    u = jnp.matmul(bq, wk, precision=hp).reshape(1, D) * inv_sqrt_d                   # bq Wk
    v = jnp.matmul(bk, wq, precision=hp).reshape(1, D) * inv_sqrt_d                   # bk Wq
    s0 = (jnp.dot(bk, bq, precision=hp) * inv_sqrt_d).reshape(1, 1)                   # bk . bq

    out = pl.pallas_call(
        _critic_attention_kernel,
        out_shape=jax.ShapeDtypeStruct((1, b_pad), jnp.float32),
        grid=(num_tiles,),
        in_specs=[
            pl.BlockSpec((Bt, D), lambda t: (t, 0)),        # query (flattened to (B_pad, D))
            pl.BlockSpec((Bt, S, D), lambda t: (t, 0, 0)),  # key
            pl.BlockSpec((Bt, S), lambda t: (t, 0)),        # mask (flattened to (B_pad, S))
            pl.BlockSpec((D, D), lambda t: (0, 0)),         # M  = Wq^T Wk / sqrt(D)
            pl.BlockSpec((1, D), lambda t: (0, 0)),         # u  = bq Wk   / sqrt(D)
            pl.BlockSpec((1, D), lambda t: (0, 0)),         # v  = bk Wq   / sqrt(D)
            pl.BlockSpec((1, 1), lambda t: (0, 0)),         # s0 = bk.bq   / sqrt(D)
        ],
        out_specs=pl.BlockSpec((1, Bt), lambda t: (0, t)),  # lane-dense output row
        compiler_params=pltpu.CompilerParams(
            dimension_semantics=("parallel",),              # lets v7x shard tiles across 2 TCs
        ),
    )(q2, k3, m2, M, u, v, s0)

    return out.reshape(b_pad)[:B].reshape(B, 1)   # matches torch.sum(..., dim=1) -> (batch, 1)


def transformer_encoder(src, layer_fn, num_layers, mask=None):
    # Faithful transcription of TransformerEncoder.forward: the ModuleList re-registers the
    # SAME encoder_layer, so re-applying one callable (shared weights) matches it exactly.
    # NOTE: re-application only type-checks when the layer preserves shape; the attention
    # layer here reduces (B,1,D)->(B,1), so it is used with num_layers=1 in the demo.
    output = src
    for _ in range(num_layers):
        output = layer_fn(output, mask)
    return output


def _init_params(d_model, key):
    # Deterministic init mimicking nn.Linear default: U(-1/sqrt(fan_in), 1/sqrt(fan_in)).
    ks = jax.random.split(key, 8)
    bound = 1.0 / jnp.sqrt(jnp.float32(d_model))
    u = lambda k, shape, b: jax.random.uniform(k, shape, jnp.float32, -b, b)
    params = {
        "wq": u(ks[0], (d_model, d_model), bound), "bq": u(ks[1], (d_model,), bound),
        "wk": u(ks[2], (d_model, d_model), bound), "bk": u(ks[3], (d_model,), bound),
        # Linear_v and FC1 exist in __init__ but are dead in forward; kept only as params.
        "wv": u(ks[4], (d_model, d_model), bound), "bv": u(ks[5], (d_model,), bound),
        "fc1_w": u(ks[6], (1, 2), 1.0 / jnp.sqrt(2.0)),
        "fc1_b": u(ks[7], (1,), 1.0 / jnp.sqrt(2.0)),
    }
    return params


def _reference(query, key, value, mask, params):
    # Pure-JAX transcription of the PyTorch forward, for the correctness check.
    hp = lax.Precision.HIGHEST
    q = jnp.einsum("bqd,ed->bqe", query, params["wq"], precision=hp) + params["bq"]
    k = jnp.einsum("bsd,ed->bse", key, params["wk"], precision=hp) + params["bk"]
    _ = jnp.einsum("bsd,ed->bse", value, params["wv"], precision=hp) + params["bv"]  # dead
    fea = key.shape[-1]
    dot = jnp.sum(k * q, axis=-1, keepdims=True) / jnp.sqrt(jnp.float32(fea))
    inv_mask = 1.0 - mask
    dot = jnp.where(inv_mask == 1.0, 0.0, dot)
    return jnp.sum(dot, axis=1)                        # (B, 1)


if __name__ == "__main__":
    B, S, D = 2, 8, 32
    root = jax.random.PRNGKey(0)
    kp, kq, kk, kv, km = jax.random.split(root, 5)

    params = _init_params(D, kp)
    query = jax.random.normal(kq, (B, 1, D), jnp.float32)
    key = jax.random.normal(kk, (B, S, D), jnp.float32)
    value = jax.random.normal(kv, (B, S, D), jnp.float32)
    # binary mask (1 = keep, 0 = zero-out), as the PyTorch code expects
    mask = (jax.random.uniform(km, (B, S, 1)) > 0.3).astype(jnp.float32)

    # TransformerEncoder.forward == python loop over the (single, shared-weight) layer.
    layer_fn = lambda src, m: critic_attention(src, key, value, m, params)
    out = transformer_encoder(query, layer_fn, num_layers=1, mask=mask)
    out = jax.block_until_ready(out)

    ref = _reference(query, key, value, mask, params)
    assert out.shape == (B, 1)
    assert jnp.allclose(out, ref, atol=1e-4, rtol=1e-4), (out, ref)
    print("KERNEL_OK")
</pallas_src>

<mosaic_0001>
module attributes {stable_mosaic.version = 11 : i64} {
  func.func @_critic_attention_kernel(%arg0: i32, %arg1: memref<128x32xf32, #tpu.memory_space<vmem>>, %arg2: memref<128x8x32xf32, #tpu.memory_space<vmem>>, %arg3: memref<128x8xf32, #tpu.memory_space<vmem>>, %arg4: memref<32x32xf32, #tpu.memory_space<vmem>>, %arg5: memref<1x32xf32, #tpu.memory_space<vmem>>, %arg6: memref<1x32xf32, #tpu.memory_space<vmem>>, %arg7: memref<1x1xf32, #tpu.memory_space<vmem>>, %arg8: memref<1x128xf32, #tpu.memory_space<vmem>>) attributes {dimension_semantics = [#tpu.dimension_semantics<parallel>], iteration_bounds = array<i64: 1>, scalar_prefetch = 0 : i64, scratch_operands = 0 : i64, tpu.core_type = #tpu.core_type<tc>, window_params = [{transform_indices = @transform_0, window_bounds = array<i64: 128, 32>}, {transform_indices = @transform_1, window_bounds = array<i64: 128, 8, 32>}, {transform_indices = @transform_2, window_bounds = array<i64: 128, 8>}, {pipeline_mode = #tpu.pipeline_mode<synchronous>, transform_indices = @transform_3, window_bounds = array<i64: 32, 32>}, {pipeline_mode = #tpu.pipeline_mode<synchronous>, transform_indices = @transform_4, window_bounds = array<i64: 1, 32>}, {pipeline_mode = #tpu.pipeline_mode<synchronous>, transform_indices = @transform_5, window_bounds = array<i64: 1, 32>}, {pipeline_mode = #tpu.pipeline_mode<synchronous>, transform_indices = @transform_6, window_bounds = array<i64: 1, 1>}, {transform_indices = @transform_7, window_bounds = array<i64: 1, 128>}]} {
    %c0 = arith.constant 0 : index
    %c0_0 = arith.constant 0 : index
    %0 = vector.load %arg1[%c0, %c0_0] : memref<128x32xf32, #tpu.memory_space<vmem>>, vector<128x32xf32>
    %c0_1 = arith.constant 0 : index
    %c0_2 = arith.constant 0 : index
    %1 = vector.load %arg4[%c0_1, %c0_2] : memref<32x32xf32, #tpu.memory_space<vmem>>, vector<32x32xf32>
    %cst = arith.constant dense<0.000000e+00> : vector<128x32xf32>
    %2 = tpu.matmul %0, %1, %cst {dimension_numbers = #tpu.dot_dimension_numbers<[1], [0], [0], [1], [0, 0, 1, 1], [], []>} : vector<128x32xf32>, vector<32x32xf32>, vector<128x32xf32> -> vector<128x32xf32>
    %c0_3 = arith.constant 0 : index
    %c0_4 = arith.constant 0 : index
    %3 = vector.load %arg5[%c0_3, %c0_4] : memref<1x32xf32, #tpu.memory_space<vmem>>, vector<1x32xf32>
    %4 = vector.broadcast %3 : vector<1x32xf32> to vector<128x32xf32>
    %5 = arith.addf %2, %4 : vector<128x32xf32>
    %c0_5 = arith.constant 0 : index
    %c0_6 = arith.constant 0 : index
    %6 = vector.load %arg6[%c0_5, %c0_6] : memref<1x32xf32, #tpu.memory_space<vmem>>, vector<1x32xf32>
    %7 = vector.broadcast %6 : vector<1x32xf32> to vector<128x32xf32>
    %8 = arith.mulf %0, %7 : vector<128x32xf32>
    %cst_7 = arith.constant dense<0.000000e+00> : vector<128xf32>
    %9 = vector.multi_reduction <add>, %8, %cst_7 [1] : vector<128x32xf32> to vector<128xf32>
    %10 = vector.shape_cast %9 : vector<128xf32> to vector<128x1xf32>
    %c0_8 = arith.constant 0 : index
    %c0_9 = arith.constant 0 : index
    %11 = vector.load %arg7[%c0_8, %c0_9] : memref<1x1xf32, #tpu.memory_space<vmem>>, vector<1x1xf32>
    %12 = vector.broadcast %11 : vector<1x1xf32> to vector<128x1xf32>
    %13 = arith.addf %10, %12 : vector<128x1xf32>
    %c0_10 = arith.constant 0 : index
    %c0_11 = arith.constant 0 : index
    %c0_12 = arith.constant 0 : index
    %14 = vector.load %arg2[%c0_10, %c0_11, %c0_12] : memref<128x8x32xf32, #tpu.memory_space<vmem>>, vector<128x8x32xf32>
    %15 = vector.shape_cast %5 : vector<128x32xf32> to vector<128x1x32xf32>
    %16 = vector.broadcast %15 : vector<128x1x32xf32> to vector<128x8x32xf32>
    %17 = arith.mulf %14, %16 : vector<128x8x32xf32>
    %cst_13 = arith.constant dense<0.000000e+00> : vector<128x8xf32>
    %18 = vector.multi_reduction <add>, %17, %cst_13 [2] : vector<128x8x32xf32> to vector<128x8xf32>
    %19 = vector.broadcast %13 : vector<128x1xf32> to vector<128x8xf32>
    %20 = arith.addf %18, %19 : vector<128x8xf32>
    %c0_14 = arith.constant 0 : index
    %c0_15 = arith.constant 0 : index
    %21 = vector.load %arg3[%c0_14, %c0_15] : memref<128x8xf32, #tpu.memory_space<vmem>>, vector<128x8xf32>
    %22 = arith.mulf %20, %21 : vector<128x8xf32>
    %cst_16 = arith.constant dense<0.000000e+00> : vector<128xf32>
    %23 = vector.multi_reduction <add>, %22, %cst_16 [1] : vector<128x8xf32> to vector<128xf32>
    %24 = vector.shape_cast %23 : vector<128xf32> to vector<1x128xf32>
    %c0_17 = arith.constant 0 : index
    %c0_18 = arith.constant 0 : index
    %25 = vector.load %arg8[%c0_17, %c0_18] : memref<1x128xf32, #tpu.memory_space<vmem>>, vector<1x128xf32>
    tpu.vector_store %arg8[%c0_17, %c0_18], %24 {strides = array<i32>} : memref<1x128xf32, #tpu.memory_space<vmem>>, vector<1x128xf32>,
    return
  }
  func.func @transform_0(%arg0: i32) -> (i32, i32) {
    %c0_i32 = arith.constant 0 : i32
    %c0_i32_0 = arith.constant 0 : i32
    return %arg0, %c0_i32 : i32, i32
  }
  func.func @transform_1(%arg0: i32) -> (i32, i32, i32) {
    %c0_i32 = arith.constant 0 : i32
    %c0_i32_0 = arith.constant 0 : i32
    %c0_i32_1 = arith.constant 0 : i32
    return %arg0, %c0_i32, %c0_i32_0 : i32, i32, i32
  }
  func.func @transform_2(%arg0: i32) -> (i32, i32) {
    %c0_i32 = arith.constant 0 : i32
    %c0_i32_0 = arith.constant 0 : i32
    return %arg0, %c0_i32 : i32, i32
  }
  func.func @transform_3(%arg0: i32) -> (i32, i32) {
    %c0_i32 = arith.constant 0 : i32
    %c0_i32_0 = arith.constant 0 : i32
    %c0_i32_1 = arith.constant 0 : i32
    return %c0_i32, %c0_i32_0 : i32, i32
  }
  func.func @transform_4(%arg0: i32) -> (i32, i32) {
    %c0_i32 = arith.constant 0 : i32
    %c0_i32_0 = arith.constant 0 : i32
    %c0_i32_1 = arith.constant 0 : i32
    return %c0_i32, %c0_i32_0 : i32, i32
  }
  func.func @transform_5(%arg0: i32) -> (i32, i32) {
    %c0_i32 = arith.constant 0 : i32
    %c0_i32_0 = arith.constant 0 : i32
    %c0_i32_1 = arith.constant 0 : i32
    return %c0_i32, %c0_i32_0 : i32, i32
  }
  func.func @transform_6(%arg0: i32) -> (i32, i32) {
    %c0_i32 = arith.constant 0 : i32
    %c0_i32_0 = arith.constant 0 : i32
    %c0_i32_1 = arith.constant 0 : i32
    return %c0_i32, %c0_i32_0 : i32, i32
  }
  func.func @transform_7(%arg0: i32) -> (i32, i32) {
    %c0_i32 = arith.constant 0 : i32
    %c0_i32_0 = arith.constant 0 : i32
    return %c0_i32, %arg0 : i32, i32
  }
}

</mosaic_0001>

<llo_original>
// kernel: tpu_custom_call.1
$region0: #{tpu_custom_call.1}
  #allocation0 [shape = 'u32[]', space=smem, size = 0x4, offset = 0x4, fixed_abs, tag = 'smem constant byte address 0x4 - core index']
  #allocation1 [shape = 'u32[72,128]{1,0:T(1,128)}', space=vmem, size = 0x9000, scoped, tag = 'internal scratch']
  #allocation2 [shape = 'f32[1,1]{1,0:T(1,128)S(1)}', space=vmem, size = 0x200, scoped, tag = 'scoped memory for tpu_custom_call.1']
  %s0 = inlined_call_operand.vmem [shape: f32[128,32], index: 0, kind: input, shape index: {}]
  %s1 = inlined_call_operand.vmem [shape: f32[128,8,32], index: 1, kind: input, shape index: {}]
  %s2 = inlined_call_operand.vmem [shape: f32[128,8], index: 2, kind: input, shape index: {}]
  %s3 = inlined_call_operand.vmem [shape: f32[32,32], index: 3, kind: input, shape index: {}]
  %s4 = inlined_call_operand.vmem [shape: f32[1,32], index: 4, kind: input, shape index: {}]
  %s5 = inlined_call_operand.vmem [shape: f32[1,32], index: 5, kind: input, shape index: {}]
  %s6 = inlined_call_operand.<no memory space> [shape: f32[1,1], index: 6, kind: input, shape index: {}]
  %s7 = inlined_call_operand.hbm [shape: f32[1,128], index: 7, kind: output, shape index: {}]
  %s8 = sld [smem:[#allocation0]]
  $region38: #{tpu_custom_call.1} parent=0
    _
  %s10 = ssub.s32 1, %s8
  %s11 = scalar_select 0, %s10, %s8
  %v12 = vstv %s6
  %13 = vst [vmem:[#allocation2] sm:$0x1] %v12
  $region1: #{tpu_custom_call.1} parent=0
    #allocation3 [shape = 'u8[512]{0}', space=vmem, size = 0x400, scoped, tag = 'output window, operand 0, single buffered']
    #allocation4 [shape = 's32[1]{0}', space=sflag, size = 0x4, scoped, tag = 'scoped memory for tpu_custom_call.1']
    %14 = vsyncpa [#allocation4], 0
    // Predicated region
    $region2: #{tpu_custom_call.1} parent=1 // pred_check
      _
    $region3: #{tpu_custom_call.1} parent=1 // pred_check_branch
      %16 = sbr.rel (0) target = $region5
    $region4: #{tpu_custom_call.1} parent=1 // pred_region
      _
    $region5: #{tpu_custom_call.1} parent=1 // pred_fallthru
      _
    // Predicated region
    $region6: #{tpu_custom_call.1} parent=1 // pred_check
      _
    $region7: #{tpu_custom_call.1} parent=1 // pred_check_branch
      %18 = sbr.rel (0) target = $region9
    $region8: #{tpu_custom_call.1} parent=1 // pred_region
      _
    $region9: #{tpu_custom_call.1} parent=1 // pred_fallthru
      _
    // Predicated region
    $region10: #{tpu_custom_call.1} parent=1 // pred_check
      _
    $region11: #{tpu_custom_call.1} parent=1 // pred_check_branch
      %20 = sbr.rel (0) target = $region13
    $region12: #{tpu_custom_call.1} parent=1 // pred_region
      _
    $region13: #{tpu_custom_call.1} parent=1 // pred_fallthru
      _
    // Predicated region
    $region14: #{tpu_custom_call.1} parent=1 // pred_check
      _
    $region15: #{tpu_custom_call.1} parent=1 // pred_check_branch
      %22 = sbr.rel (0) target = $region17
    $region16: #{tpu_custom_call.1} parent=1 // pred_region
      _
    $region17: #{tpu_custom_call.1} parent=1 // pred_fallthru
      _
    // Predicated region
    $region18: #{tpu_custom_call.1} parent=1 // pred_check
      _
    $region19: #{tpu_custom_call.1} parent=1 // pred_check_branch
      %24 = sbr.rel (0) target = $region21
    $region20: #{tpu_custom_call.1} parent=1 // pred_region
      _
    $region21: #{tpu_custom_call.1} parent=1 // pred_fallthru
      _
    // Predicated region
    $region22: #{tpu_custom_call.1} parent=1 // pred_check
      _
    $region23: #{tpu_custom_call.1} parent=1 // pred_check_branch
      %26 = sbr.rel (0) target = $region25
    $region24: #{tpu_custom_call.1} parent=1 // pred_region
      _
    $region25: #{tpu_custom_call.1} parent=1 // pred_fallthru
      _
    // Predicated region
    $region26: #{tpu_custom_call.1} parent=1 // pred_check
      _
    $region27: #{tpu_custom_call.1} parent=1 // pred_check_branch
      %28 = sbr.rel (0) target = $region29
    $region28: #{tpu_custom_call.1} parent=1 // pred_region
      _
    $region29: #{tpu_custom_call.1} parent=1 // pred_fallthru
      _
    %v29 = vld [vmem:[%s0] sm:$0xff]
    %v30 = vld [vmem:[%s0 + $0x8] sm:$0xff]
    %v31 = vld [vmem:[%s0 + $0x10] sm:$0xff]
    %v32 = vld [vmem:[%s0 + $0x18] sm:$0xff]
    %v33 = vld [vmem:[%s0 + $0x20] sm:$0xff]
    %v34 = vld [vmem:[%s0 + $0x28] sm:$0xff]
    %v35 = vld [vmem:[%s0 + $0x30] sm:$0xff]
    %v36 = vld [vmem:[%s0 + $0x38] sm:$0xff]
    %v37 = vld [vmem:[%s0 + $0x40] sm:$0xff]
    %v38 = vld [vmem:[%s0 + $0x48] sm:$0xff]
    %v39 = vld [vmem:[%s0 + $0x50] sm:$0xff]
    %v40 = vld [vmem:[%s0 + $0x58] sm:$0xff]
    %v41 = vld [vmem:[%s0 + $0x60] sm:$0xff]
    %v42 = vld [vmem:[%s0 + $0x68] sm:$0xff]
    %v43 = vld [vmem:[%s0 + $0x70] sm:$0xff]
    %v44 = vld [vmem:[%s0 + $0x78] sm:$0xff]
    %v45 = vld [vmem:[%s3] sm:$0xff]
    %v46 = vld [vmem:[%s3 + $0x8] sm:$0xff]
    %v47 = vld [vmem:[%s3 + $0x10] sm:$0xff]
    %v48 = vld [vmem:[%s3 + $0x18] sm:$0xff]
    %v49 = vld [vmem:[%s4] sm:$0x1]
    %v51 = vperm.slane %v49, 0
    %vm53 = vcmask 261120
    %v55 = vsel %vm53, %v29, 0
    %v58 = vsel %vm53, %v30, 0
    %v61 = vsel %vm53, %v31, 0
    %v64 = vsel %vm53, %v32, 0
    %v67 = vsel %vm53, %v33, 0
    %v70 = vsel %vm53, %v34, 0
    %v73 = vsel %vm53, %v35, 0
    %v76 = vsel %vm53, %v36, 0
    %v79 = vsel %vm53, %v37, 0
    %v82 = vsel %vm53, %v38, 0
    %v85 = vsel %vm53, %v39, 0
    %v88 = vsel %vm53, %v40, 0
    %v91 = vsel %vm53, %v41, 0
    %v94 = vsel %vm53, %v42, 0
    %v97 = vsel %vm53, %v43, 0
    %v100 = vsel %vm53, %v44, 0
    %102 = vmatpush.msra.mxu0 0.0
    %103 = vmatpush.msra.mxu0 0.0
    %104 = vmatpush.msra.mxu0 0.0
    %105 = vmatpush.msra.mxu0 0.0
    %106 = vmatpush.msra.mxu0 0.0
    %107 = vmatpush.msra.mxu0 0.0
    %108 = vmatpush.msra.mxu0 0.0
    %109 = vmatpush.msra.mxu0 0.0
    %110 = vmatpush.msra.mxu0 0.0
    %111 = vmatpush.msra.mxu0 0.0
    %112 = vmatpush.msra.mxu0 0.0
    %113 = vmatpush.msra.mxu0 0.0
    %114 = vmatpush.msra.mxu0 %v48
    %115 = vmatpush.msra.mxu0 %v47
    %116 = vmatpush.msra.mxu0 %v46
    %117 = vmatpush.msra.mxu0 %v45
    %118 = vmatmul.f32.gmra.mxu0 %v55
    %v119 = vpop.f32.mrf.mxu0
    %v120 = vadd.f32 %v51, %v119
    %121 = vmatmul.f32.gmra.mxu0 %v58
    %v122 = vpop.f32.mrf.mxu0
    %v123 = vadd.f32 %v51, %v122
    %124 = vmatmul.f32.gmra.mxu0 %v61
    %v125 = vpop.f32.mrf.mxu0
    %v126 = vadd.f32 %v51, %v125
    %127 = vmatmul.f32.gmra.mxu0 %v64
    %v128 = vpop.f32.mrf.mxu0
    %v129 = vadd.f32 %v51, %v128
    %130 = vmatmul.f32.gmra.mxu0 %v67
    %v131 = vpop.f32.mrf.mxu0
    %v132 = vadd.f32 %v51, %v131
    %133 = vmatmul.f32.gmra.mxu0 %v70
    %v134 = vpop.f32.mrf.mxu0
    %v135 = vadd.f32 %v51, %v134
    %136 = vmatmul.f32.gmra.mxu0 %v73
    %v137 = vpop.f32.mrf.mxu0
    %v138 = vadd.f32 %v51, %v137
    %139 = vmatmul.f32.gmra.mxu0 %v76
    %v140 = vpop.f32.mrf.mxu0
    %v141 = vadd.f32 %v51, %v140
    %142 = vmatmul.f32.gmra.mxu0 %v79
    %v143 = vpop.f32.mrf.mxu0
    %v144 = vadd.f32 %v51, %v143
    %145 = vmatmul.f32.gmra.mxu0 %v82
    %v146 = vpop.f32.mrf.mxu0
    %v147 = vadd.f32 %v51, %v146
    %148 = vmatmul.f32.gmra.mxu0 %v85
    %v149 = vpop.f32.mrf.mxu0
    %v150 = vadd.f32 %v51, %v149
    %151 = vmatmul.f32.gmra.mxu0 %v88
    %v152 = vpop.f32.mrf.mxu0
    %v153 = vadd.f32 %v51, %v152
    %154 = vmatmul.f32.gmra.mxu0 %v91
    %v155 = vpop.f32.mrf.mxu0
    %v156 = vadd.f32 %v51, %v155
    %157 = vmatmul.f32.gmra.mxu0 %v94
    %v158 = vpop.f32.mrf.mxu0
    %v159 = vadd.f32 %v51, %v158
    %160 = vmatmul.f32.gmra.mxu0 %v97
    %v161 = vpop.f32.mrf.mxu0
    %v162 = vadd.f32 %v51, %v161
    %163 = vmatmul.f32.gmra.mxu0 %v100
    %v164 = vpop.f32.mrf.mxu0
    %v165 = vadd.f32 %v51, %v164
    %166 = vdwg.mxu0
    %v167 = vld [vmem:[%s5] sm:$0x1]
    %v169 = vperm.slane %v167, 0
    %v171 = vmul.f32 %v29, %v169
    %v172 = vmul.f32 %v30, %v169
    %v173 = vmul.f32 %v31, %v169
    %v174 = vmul.f32 %v32, %v169
    %v175 = vmul.f32 %v33, %v169
    %v176 = vmul.f32 %v34, %v169
    %v177 = vmul.f32 %v35, %v169
    %v178 = vmul.f32 %v36, %v169
    %v179 = vmul.f32 %v37, %v169
    %v180 = vmul.f32 %v38, %v169
    %v181 = vmul.f32 %v39, %v169
    %v182 = vmul.f32 %v40, %v169
    %v183 = vmul.f32 %v41, %v169
    %v184 = vmul.f32 %v42, %v169
    %v185 = vmul.f32 %v43, %v169
    %v186 = vmul.f32 %v44, %v169
    %v187 = vsel %vm53, %v171, 0.0
    %188 = vadd.xlane.f32.xlu0 %v187
    %v189 = vpop.xlane.xlu0 %188
    %v190 = vsel %vm53, %v172, 0.0
    %191 = vadd.xlane.f32.xlu0 %v190
    %v192 = vpop.xlane.xlu0 %191
    %v193 = vsel %vm53, %v173, 0.0
    %194 = vadd.xlane.f32.xlu0 %v193
    %v195 = vpop.xlane.xlu0 %194
    %v196 = vsel %vm53, %v174, 0.0
    %197 = vadd.xlane.f32.xlu0 %v196
    %v198 = vpop.xlane.xlu0 %197
    %v199 = vsel %vm53, %v175, 0.0
    %200 = vadd.xlane.f32.xlu0 %v199
    %v201 = vpop.xlane.xlu0 %200
    %v202 = vsel %vm53, %v176, 0.0
    %203 = vadd.xlane.f32.xlu0 %v202
    %v204 = vpop.xlane.xlu0 %203
    %v205 = vsel %vm53, %v177, 0.0
    %206 = vadd.xlane.f32.xlu0 %v205
    %v207 = vpop.xlane.xlu0 %206
    %v208 = vsel %vm53, %v178, 0.0
    %209 = vadd.xlane.f32.xlu0 %v208
    %v210 = vpop.xlane.xlu0 %209
    %v211 = vsel %vm53, %v179, 0.0
    %212 = vadd.xlane.f32.xlu0 %v211
    %v213 = vpop.xlane.xlu0 %212
    %v214 = vsel %vm53, %v180, 0.0
    %215 = vadd.xlane.f32.xlu0 %v214
    %v216 = vpop.xlane.xlu0 %215
    %v217 = vsel %vm53, %v181, 0.0
    %218 = vadd.xlane.f32.xlu0 %v217
    %v219 = vpop.xlane.xlu0 %218
    %v220 = vsel %vm53, %v182, 0.0
    %221 = vadd.xlane.f32.xlu0 %v220
    %v222 = vpop.xlane.xlu0 %221
    %v223 = vsel %vm53, %v183, 0.0
    %224 = vadd.xlane.f32.xlu0 %v223
    %v225 = vpop.xlane.xlu0 %224
    %v226 = vsel %vm53, %v184, 0.0
    %227 = vadd.xlane.f32.xlu0 %v226
    %v228 = vpop.xlane.xlu0 %227
    %v229 = vsel %vm53, %v185, 0.0
    %230 = vadd.xlane.f32.xlu0 %v229
    %v231 = vpop.xlane.xlu0 %230
    %v232 = vsel %vm53, %v186, 0.0
    %233 = vadd.xlane.f32.xlu0 %v232
    %v234 = vpop.xlane.xlu0 %233
    %v235 = vld [vmem:[#allocation2] sm:$0x1]
    %v237 = vperm.slane %v235, 0
    %v239 = vadd.f32 %v189, %v237
    %v240 = vadd.f32 %v192, %v237
    %v241 = vadd.f32 %v195, %v237
    %v242 = vadd.f32 %v198, %v237
    %v243 = vadd.f32 %v201, %v237
    %v244 = vadd.f32 %v204, %v237
    %v245 = vadd.f32 %v207, %v237
    %v246 = vadd.f32 %v210, %v237
    %v247 = vadd.f32 %v213, %v237
    %v248 = vadd.f32 %v216, %v237
    %v249 = vadd.f32 %v219, %v237
    %v250 = vadd.f32 %v222, %v237
    %v251 = vadd.f32 %v225, %v237
    %v252 = vadd.f32 %v228, %v237
    %v253 = vadd.f32 %v231, %v237
    %v254 = vadd.f32 %v234, %v237
    %v255 = vld [vmem:[%s1] sm:$0xff]
    %v256 = vld [vmem:[%s1 + $0x8] sm:$0xff]
    %v257 = vld [vmem:[%s1 + $0x10] sm:$0xff]
    %v258 = vld [vmem:[%s1 + $0x18] sm:$0xff]
    %v259 = vld [vmem:[%s1 + $0x20] sm:$0xff]
    %v260 = vld [vmem:[%s1 + $0x28] sm:$0xff]
    %v261 = vld [vmem:[%s1 + $0x30] sm:$0xff]
    %v262 = vld [vmem:[%s1 + $0x38] sm:$0xff]
    %v263 = vld [vmem:[%s1 + $0x40] sm:$0xff]
    %v264 = vld [vmem:[%s1 + $0x48] sm:$0xff]
    %v265 = vld [vmem:[%s1 + $0x50] sm:$0xff]
    %v266 = vld [vmem:[%s1 + $0x58] sm:$0xff]
    %v267 = vld [vmem:[%s1 + $0x60] sm:$0xff]
    %v268 = vld [vmem:[%s1 + $0x68] sm:$0xff]
    %v269 = vld [vmem:[%s1 + $0x70] sm:$0xff]
    %v270 = vld [vmem:[%s1 + $0x78] sm:$0xff]
    %v271 = vld [vmem:[%s1 + $0x80] sm:$0xff]
    %v272 = vld [vmem:[%s1 + $0x88] sm:$0xff]
    %v273 = vld [vmem:[%s1 + $0x90] sm:$0xff]
    %v274 = vld [vmem:[%s1 + $0x98] sm:$0xff]
    %v275 = vld [vmem:[%s1 + $0xa0] sm:$0xff]
    %v276 = vld [vmem:[%s1 + $0xa8] sm:$0xff]
    %v277 = vld [vmem:[%s1 + $0xb0] sm:$0xff]
    %v278 = vld [vmem:[%s1 + $0xb8] sm:$0xff]
    %v279 = vld [vmem:[%s1 + $0xc0] sm:$0xff]
    %v280 = vld [vmem:[%s1 + $0xc8] sm:$0xff]
    %v281 = vld [vmem:[%s1 + $0xd0] sm:$0xff]
    %v282 = vld [vmem:[%s1 + $0xd8] sm:$0xff]
    %v283 = vld [vmem:[%s1 + $0xe0] sm:$0xff]
    %v284 = vld [vmem:[%s1 + $0xe8] sm:$0xff]
    %v285 = vld [vmem:[%s1 + $0xf0] sm:$0xff]
    %v286 = vld [vmem:[%s1 + $0xf8] sm:$0xff]
    %v287 = vld [vmem:[%s1 + $0x100] sm:$0xff]
    %v288 = vld [vmem:[%s1 + $0x108] sm:$0xff]
    %v289 = vld [vmem:[%s1 + $0x110] sm:$0xff]
    %v290 = vld [vmem:[%s1 + $0x118] sm:$0xff]
    %v291 = vld [vmem:[%s1 + $0x120] sm:$0xff]
    %v292 = vld [vmem:[%s1 + $0x128] sm:$0xff]
    %v293 = vld [vmem:[%s1 + $0x130] sm:$0xff]
    %v294 = vld [vmem:[%s1 + $0x138] sm:$0xff]
    %v295 = vld [vmem:[%s1 + $0x140] sm:$0xff]
    %v296 = vld [vmem:[%s1 + $0x148] sm:$0xff]
    %v297 = vld [vmem:[%s1 + $0x150] sm:$0xff]
    %v298 = vld [vmem:[%s1 + $0x158] sm:$0xff]
    %v299 = vld [vmem:[%s1 + $0x160] sm:$0xff]
    %v300 = vld [vmem:[%s1 + $0x168] sm:$0xff]
    %v301 = vld [vmem:[%s1 + $0x170] sm:$0xff]
    %v302 = vld [vmem:[%s1 + $0x178] sm:$0xff]
    %v303 = vld [vmem:[%s1 + $0x180] sm:$0xff]
    %v304 = vld [vmem:[%s1 + $0x188] sm:$0xff]
    %v305 = vld [vmem:[%s1 + $0x190] sm:$0xff]
    %v306 = vld [vmem:[%s1 + $0x198] sm:$0xff]
    %v307 = vld [vmem:[%s1 + $0x1a0] sm:$0xff]
    %v308 = vld [vmem:[%s1 + $0x1a8] sm:$0xff]
    %v309 = vld [vmem:[%s1 + $0x1b0] sm:$0xff]
    %v310 = vld [vmem:[%s1 + $0x1b8] sm:$0xff]
    %v311 = vld [vmem:[%s1 + $0x1c0] sm:$0xff]
    %v312 = vld [vmem:[%s1 + $0x1c8] sm:$0xff]
    %v313 = vld [vmem:[%s1 + $0x1d0] sm:$0xff]
    %v314 = vld [vmem:[%s1 + $0x1d8] sm:$0xff]
    %v315 = vld [vmem:[%s1 + $0x1e0] sm:$0xff]
    %v316 = vld [vmem:[%s1 + $0x1e8] sm:$0xff]
    %v317 = vld [vmem:[%s1 + $0x1f0] sm:$0xff]
    %v318 = vld [vmem:[%s1 + $0x1f8] sm:$0xff]
    %v319 = vld [vmem:[%s1 + $0x200] sm:$0xff]
    %v320 = vld [vmem:[%s1 + $0x208] sm:$0xff]
    %v321 = vld [vmem:[%s1 + $0x210] sm:$0xff]
    %v322 = vld [vmem:[%s1 + $0x218] sm:$0xff]
    %v323 = vld [vmem:[%s1 + $0x220] sm:$0xff]
    %v324 = vld [vmem:[%s1 + $0x228] sm:$0xff]
    %v325 = vld [vmem:[%s1 + $0x230] sm:$0xff]
    %v326 = vld [vmem:[%s1 + $0x238] sm:$0xff]
    %v327 = vld [vmem:[%s1 + $0x240] sm:$0xff]
    %v328 = vld [vmem:[%s1 + $0x248] sm:$0xff]
    %v329 = vld [vmem:[%s1 + $0x250] sm:$0xff]
    %v330 = vld [vmem:[%s1 + $0x258] sm:$0xff]
    %v331 = vld [vmem:[%s1 + $0x260] sm:$0xff]
    %v332 = vld [vmem:[%s1 + $0x268] sm:$0xff]
    %v333 = vld [vmem:[%s1 + $0x270] sm:$0xff]
    %v334 = vld [vmem:[%s1 + $0x278] sm:$0xff]
    %v335 = vld [vmem:[%s1 + $0x280] sm:$0xff]
    %v336 = vld [vmem:[%s1 + $0x288] sm:$0xff]
    %v337 = vld [vmem:[%s1 + $0x290] sm:$0xff]
    %v338 = vld [vmem:[%s1 + $0x298] sm:$0xff]
    %v339 = vld [vmem:[%s1 + $0x2a0] sm:$0xff]
    %v340 = vld [vmem:[%s1 + $0x2a8] sm:$0xff]
    %v341 = vld [vmem:[%s1 + $0x2b0] sm:$0xff]
    %v342 = vld [vmem:[%s1 + $0x2b8] sm:$0xff]
    %v343 = vld [vmem:[%s1 + $0x2c0] sm:$0xff]
    %v344 = vld [vmem:[%s1 + $0x2c8] sm:$0xff]
    %v345 = vld [vmem:[%s1 + $0x2d0] sm:$0xff]
    %v346 = vld [vmem:[%s1 + $0x2d8] sm:$0xff]
    %v347 = vld [vmem:[%s1 + $0x2e0] sm:$0xff]
    %v348 = vld [vmem:[%s1 + $0x2e8] sm:$0xff]
    %v349 = vld [vmem:[%s1 + $0x2f0] sm:$0xff]
    %v350 = vld [vmem:[%s1 + $0x2f8] sm:$0xff]
    %v351 = vld [vmem:[%s1 + $0x300] sm:$0xff]
    %v352 = vld [vmem:[%s1 + $0x308] sm:$0xff]
    %v353 = vld [vmem:[%s1 + $0x310] sm:$0xff]
    %v354 = vld [vmem:[%s1 + $0x318] sm:$0xff]
    %v355 = vld [vmem:[%s1 + $0x320] sm:$0xff]
    %v356 = vld [vmem:[%s1 + $0x328] sm:$0xff]
    %v357 = vld [vmem:[%s1 + $0x330] sm:$0xff]
    %v358 = vld [vmem:[%s1 + $0x338] sm:$0xff]
    %v359 = vld [vmem:[%s1 + $0x340] sm:$0xff]
    %v360 = vld [vmem:[%s1 + $0x348] sm:$0xff]
    %v361 = vld [vmem:[%s1 + $0x350] sm:$0xff]
    %v362 = vld [vmem:[%s1 + $0x358] sm:$0xff]
    %v363 = vld [vmem:[%s1 + $0x360] sm:$0xff]
    %v364 = vld [vmem:[%s1 + $0x368] sm:$0xff]
    %v365 = vld [vmem:[%s1 + $0x370] sm:$0xff]
    %v366 = vld [vmem:[%s1 + $0x378] sm:$0xff]
    %v367 = vld [vmem:[%s1 + $0x380] sm:$0xff]
    %v368 = vld [vmem:[%s1 + $0x388] sm:$0xff]
    %v369 = vld [vmem:[%s1 + $0x390] sm:$0xff]
    %v370 = vld [vmem:[%s1 + $0x398] sm:$0xff]
    %v371 = vld [vmem:[%s1 + $0x3a0] sm:$0xff]
    %v372 = vld [vmem:[%s1 + $0x3a8] sm:$0xff]
    %v373 = vld [vmem:[%s1 + $0x3b0] sm:$0xff]
    %v374 = vld [vmem:[%s1 + $0x3b8] sm:$0xff]
    %v375 = vld [vmem:[%s1 + $0x3c0] sm:$0xff]
    %v376 = vld [vmem:[%s1 + $0x3c8] sm:$0xff]
    %v377 = vld [vmem:[%s1 + $0x3d0] sm:$0xff]
    %v378 = vld [vmem:[%s1 + $0x3d8] sm:$0xff]
    %v379 = vld [vmem:[%s1 + $0x3e0] sm:$0xff]
    %v380 = vld [vmem:[%s1 + $0x3e8] sm:$0xff]
    %v381 = vld [vmem:[%s1 + $0x3f0] sm:$0xff]
    %v382 = vld [vmem:[%s1 + $0x3f8] sm:$0xff]
    %v399 = vrot.slane %v120, 1
    %v400 = vrot.slane %v120, 2
    %v401 = vrot.slane %v120, 3
    %v402 = vrot.slane %v120, 4
    %v403 = vrot.slane %v120, 5
    %v404 = vrot.slane %v120, 6
    %v405 = vrot.slane %v120, 7
    %v406 = vrot.slane %v123, 1
    %v407 = vrot.slane %v123, 2
    %v408 = vrot.slane %v123, 3
    %v409 = vrot.slane %v123, 4
    %v410 = vrot.slane %v123, 5
    %v411 = vrot.slane %v123, 6
    %v412 = vrot.slane %v123, 7
    %v413 = vrot.slane %v126, 1
    %v414 = vrot.slane %v126, 2
    %v415 = vrot.slane %v126, 3
    %v416 = vrot.slane %v126, 4
    %v417 = vrot.slane %v126, 5
    %v418 = vrot.slane %v126, 6
    %v419 = vrot.slane %v126, 7
    %v420 = vrot.slane %v129, 1
    %v421 = vrot.slane %v129, 2
    %v422 = vrot.slane %v129, 3
    %v423 = vrot.slane %v129, 4
    %v424 = vrot.slane %v129, 5
    %v425 = vrot.slane %v129, 6
    %v426 = vrot.slane %v129, 7
    %v427 = vrot.slane %v132, 1
    %v428 = vrot.slane %v132, 2
    %v429 = vrot.slane %v132, 3
    %v430 = vrot.slane %v132, 4
    %v431 = vrot.slane %v132, 5
    %v432 = vrot.slane %v132, 6
    %v433 = vrot.slane %v132, 7
    %v434 = vrot.slane %v135, 1
    %v435 = vrot.slane %v135, 2
    %v436 = vrot.slane %v135, 3
    %v437 = vrot.slane %v135, 4
    %v438 = vrot.slane %v135, 5
    %v439 = vrot.slane %v135, 6
    %v440 = vrot.slane %v135, 7
    %v441 = vrot.slane %v138, 1
    %v442 = vrot.slane %v138, 2
    %v443 = vrot.slane %v138, 3
    %v444 = vrot.slane %v138, 4
    %v445 = vrot.slane %v138, 5
    %v446 = vrot.slane %v138, 6
    %v447 = vrot.slane %v138, 7
    %v448 = vrot.slane %v141, 1
    %v449 = vrot.slane %v141, 2
    %v450 = vrot.slane %v141, 3
    %v451 = vrot.slane %v141, 4
    %v452 = vrot.slane %v141, 5
    %v453 = vrot.slane %v141, 6
    %v454 = vrot.slane %v141, 7
    %v455 = vrot.slane %v144, 1
    %v456 = vrot.slane %v144, 2
    %v457 = vrot.slane %v144, 3
    %v458 = vrot.slane %v144, 4
    %v459 = vrot.slane %v144, 5
    %v460 = vrot.slane %v144, 6
    %v461 = vrot.slane %v144, 7
    %v462 = vrot.slane %v147, 1
    %v463 = vrot.slane %v147, 2
    %v464 = vrot.slane %v147, 3
    %v465 = vrot.slane %v147, 4
    %v466 = vrot.slane %v147, 5
    %v467 = vrot.slane %v147, 6
    %v468 = vrot.slane %v147, 7
    %v469 = vrot.slane %v150, 1
    %v470 = vrot.slane %v150, 2
    %v471 = vrot.slane %v150, 3
    %v472 = vrot.slane %v150, 4
    %v473 = vrot.slane %v150, 5
    %v474 = vrot.slane %v150, 6
    %v475 = vrot.slane %v150, 7
    %v476 = vrot.slane %v153, 1
    %v477 = vrot.slane %v153, 2
    %v478 = vrot.slane %v153, 3
    %v479 = vrot.slane %v153, 4
    %v480 = vrot.slane %v153, 5
    %v481 = vrot.slane %v153, 6
    %v482 = vrot.slane %v153, 7
    %v483 = vrot.slane %v156, 1
    %v484 = vrot.slane %v156, 2
    %v485 = vrot.slane %v156, 3
    %v486 = vrot.slane %v156, 4
    %v487 = vrot.slane %v156, 5
    %v488 = vrot.slane %v156, 6
    %v489 = vrot.slane %v156, 7
    %v490 = vrot.slane %v159, 1
    %v491 = vrot.slane %v159, 2
    %v492 = vrot.slane %v159, 3
    %v493 = vrot.slane %v159, 4
    %v494 = vrot.slane %v159, 5
    %v495 = vrot.slane %v159, 6
    %v496 = vrot.slane %v159, 7
    %v497 = vrot.slane %v162, 1
    %v498 = vrot.slane %v162, 2
    %v499 = vrot.slane %v162, 3
    %v500 = vrot.slane %v162, 4
    %v501 = vrot.slane %v162, 5
    %v502 = vrot.slane %v162, 6
    %v503 = vrot.slane %v162, 7
    %v504 = vrot.slane %v165, 1
    %v505 = vrot.slane %v165, 2
    %v506 = vrot.slane %v165, 3
    %v507 = vrot.slane %v165, 4
    %v508 = vrot.slane %v165, 5
    %v509 = vrot.slane %v165, 6
    %v510 = vrot.slane %v165, 7
    %v511 = vperm.slane %v120, 0
    %v512 = vperm.slane %v399, 0
    %v513 = vperm.slane %v400, 0
    %v514 = vperm.slane %v401, 0
    %v515 = vperm.slane %v402, 0
    %v516 = vperm.slane %v403, 0
    %v517 = vperm.slane %v404, 0
    %v518 = vperm.slane %v405, 0
    %v519 = vperm.slane %v123, 0
    %v520 = vperm.slane %v406, 0
    %v521 = vperm.slane %v407, 0
    %v522 = vperm.slane %v408, 0
    %v523 = vperm.slane %v409, 0
    %v524 = vperm.slane %v410, 0
    %v525 = vperm.slane %v411, 0
    %v526 = vperm.slane %v412, 0
    %v527 = vperm.slane %v126, 0
    %v528 = vperm.slane %v413, 0
    %v529 = vperm.slane %v414, 0
    %v530 = vperm.slane %v415, 0
    %v531 = vperm.slane %v416, 0
    %v532 = vperm.slane %v417, 0
    %v533 = vperm.slane %v418, 0
    %v534 = vperm.slane %v419, 0
    %v535 = vperm.slane %v129, 0
    %v536 = vperm.slane %v420, 0
    %v537 = vperm.slane %v421, 0
    %v538 = vperm.slane %v422, 0
    %v539 = vperm.slane %v423, 0
    %v540 = vperm.slane %v424, 0
    %v541 = vperm.slane %v425, 0
    %v542 = vperm.slane %v426, 0
    %v543 = vperm.slane %v132, 0
    %v544 = vperm.slane %v427, 0
    %v545 = vperm.slane %v428, 0
    %v546 = vperm.slane %v429, 0
    %v547 = vperm.slane %v430, 0
    %v548 = vperm.slane %v431, 0
    %v549 = vperm.slane %v432, 0
    %v550 = vperm.slane %v433, 0
    %v551 = vperm.slane %v135, 0
    %v552 = vperm.slane %v434, 0
    %v553 = vperm.slane %v435, 0
    %v554 = vperm.slane %v436, 0
    %v555 = vperm.slane %v437, 0
    %v556 = vperm.slane %v438, 0
    %v557 = vperm.slane %v439, 0
    %v558 = vperm.slane %v440, 0
    %v559 = vperm.slane %v138, 0
    %v560 = vperm.slane %v441, 0
    %v561 = vperm.slane %v442, 0
    %v562 = vperm.slane %v443, 0
    %v563 = vperm.slane %v444, 0
    %v564 = vperm.slane %v445, 0
    %v565 = vperm.slane %v446, 0
    %v566 = vperm.slane %v447, 0
    %v567 = vperm.slane %v141, 0
    %v568 = vperm.slane %v448, 0
    %v569 = vperm.slane %v449, 0
    %v570 = vperm.slane %v450, 0
    %v571 = vperm.slane %v451, 0
    %v572 = vperm.slane %v452, 0
    %v573 = vperm.slane %v453, 0
    %v574 = vperm.slane %v454, 0
    %v575 = vperm.slane %v144, 0
    %v576 = vperm.slane %v455, 0
    %v577 = vperm.slane %v456, 0
    %v578 = vperm.slane %v457, 0
    %v579 = vperm.slane %v458, 0
    %v580 = vperm.slane %v459, 0
    %v581 = vperm.slane %v460, 0
    %v582 = vperm.slane %v461, 0
    %v583 = vperm.slane %v147, 0
    %v584 = vperm.slane %v462, 0
    %v585 = vperm.slane %v463, 0
    %v586 = vperm.slane %v464, 0
    %v587 = vperm.slane %v465, 0
    %v588 = vperm.slane %v466, 0
    %v589 = vperm.slane %v467, 0
    %v590 = vperm.slane %v468, 0
    %v591 = vperm.slane %v150, 0
    %v592 = vperm.slane %v469, 0
    %v593 = vperm.slane %v470, 0
    %v594 = vperm.slane %v471, 0
    %v595 = vperm.slane %v472, 0
    %v596 = vperm.slane %v473, 0
    %v597 = vperm.slane %v474, 0
    %v598 = vperm.slane %v475, 0
    %v599 = vperm.slane %v153, 0
    %v600 = vperm.slane %v476, 0
    %v601 = vperm.slane %v477, 0
    %v602 = vperm.slane %v478, 0
    %v603 = vperm.slane %v479, 0
    %v604 = vperm.slane %v480, 0
    %v605 = vperm.slane %v481, 0
    %v606 = vperm.slane %v482, 0
    %v607 = vperm.slane %v156, 0
    %v608 = vperm.slane %v483, 0
    %v609 = vperm.slane %v484, 0
    %v610 = vperm.slane %v485, 0
    %v611 = vperm.slane %v486, 0
    %v612 = vperm.slane %v487, 0
    %v613 = vperm.slane %v488, 0
    %v614 = vperm.slane %v489, 0
    %v615 = vperm.slane %v159, 0
    %v616 = vperm.slane %v490, 0
    %v617 = vperm.slane %v491, 0
    %v618 = vperm.slane %v492, 0
    %v619 = vperm.slane %v493, 0
    %v620 = vperm.slane %v494, 0
    %v621 = vperm.slane %v495, 0
    %v622 = vperm.slane %v496, 0
    %v623 = vperm.slane %v162, 0
    %v624 = vperm.slane %v497, 0
    %v625 = vperm.slane %v498, 0
    %v626 = vperm.slane %v499, 0
    %v627 = vperm.slane %v500, 0
    %v628 = vperm.slane %v501, 0
    %v629 = vperm.slane %v502, 0
    %v630 = vperm.slane %v503, 0
    %v631 = vperm.slane %v165, 0
    %v632 = vperm.slane %v504, 0
    %v633 = vperm.slane %v505, 0
    %v634 = vperm.slane %v506, 0
    %v635 = vperm.slane %v507, 0
    %v636 = vperm.slane %v508, 0
    %v637 = vperm.slane %v509, 0
    %v638 = vperm.slane %v510, 0
    %v767 = vmul.f32 %v255, %v511
    %v768 = vmul.f32 %v256, %v512
    %v769 = vmul.f32 %v257, %v513
    %v770 = vmul.f32 %v258, %v514
    %v771 = vmul.f32 %v259, %v515
    %v772 = vmul.f32 %v260, %v516
    %v773 = vmul.f32 %v261, %v517
    %v774 = vmul.f32 %v262, %v518
    %v775 = vmul.f32 %v263, %v519
    %v776 = vmul.f32 %v264, %v520
    %v777 = vmul.f32 %v265, %v521
    %v778 = vmul.f32 %v266, %v522
    %v779 = vmul.f32 %v267, %v523
    %v780 = vmul.f32 %v268, %v524
    %v781 = vmul.f32 %v269, %v525
    %v782 = vmul.f32 %v270, %v526
    %v783 = vmul.f32 %v271, %v527
    %v784 = vmul.f32 %v272, %v528
    %v785 = vmul.f32 %v273, %v529
    %v786 = vmul.f32 %v274, %v530
    %v787 = vmul.f32 %v275, %v531
    %v788 = vmul.f32 %v276, %v532
    %v789 = vmul.f32 %v277, %v533
    %v790 = vmul.f32 %v278, %v534
    %v791 = vmul.f32 %v279, %v535
    %v792 = vmul.f32 %v280, %v536
    %v793 = vmul.f32 %v281, %v537
    %v794 = vmul.f32 %v282, %v538
    %v795 = vmul.f32 %v283, %v539
    %v796 = vmul.f32 %v284, %v540
    %v797 = vmul.f32 %v285, %v541
    %v798 = vmul.f32 %v286, %v542
    %v799 = vmul.f32 %v287, %v543
    %v800 = vmul.f32 %v288, %v544
    %v801 = vmul.f32 %v289, %v545
    %v802 = vmul.f32 %v290, %v546
    %v803 = vmul.f32 %v291, %v547
    %v804 = vmul.f32 %v292, %v548
    %v805 = vmul.f32 %v293, %v549
    %v806 = vmul.f32 %v294, %v550
    %v807 = vmul.f32 %v295, %v551
    %v808 = vmul.f32 %v296, %v552
    %v809 = vmul.f32 %v297, %v553
    %v810 = vmul.f32 %v298, %v554
    %v811 = vmul.f32 %v299, %v555
    %v812 = vmul.f32 %v300, %v556
    %v813 = vmul.f32 %v301, %v557
    %v814 = vmul.f32 %v302, %v558
    %v815 = vmul.f32 %v303, %v559
    %v816 = vmul.f32 %v304, %v560
    %v817 = vmul.f32 %v305, %v561
    %v818 = vmul.f32 %v306, %v562
    %v819 = vmul.f32 %v307, %v563
    %v820 = vmul.f32 %v308, %v564
    %v821 = vmul.f32 %v309, %v565
    %v822 = vmul.f32 %v310, %v566
    %v823 = vmul.f32 %v311, %v567
    %v824 = vmul.f32 %v312, %v568
    %v825 = vmul.f32 %v313, %v569
    %v826 = vmul.f32 %v314, %v570
    %v827 = vmul.f32 %v315, %v571
    %v828 = vmul.f32 %v316, %v572
    %v829 = vmul.f32 %v317, %v573
    %v830 = vmul.f32 %v318, %v574
    %v831 = vmul.f32 %v319, %v575
    %v832 = vmul.f32 %v320, %v576
    %v833 = vmul.f32 %v321, %v577
    %v834 = vmul.f32 %v322, %v578
    %v835 = vmul.f32 %v323, %v579
    %v836 = vmul.f32 %v324, %v580
    %v837 = vmul.f32 %v325, %v581
    %v838 = vmul.f32 %v326, %v582
    %v839 = vmul.f32 %v327, %v583
    %v840 = vmul.f32 %v328, %v584
    %v841 = vmul.f32 %v329, %v585
    %v842 = vmul.f32 %v330, %v586
    %v843 = vmul.f32 %v331, %v587
    %v844 = vmul.f32 %v332, %v588
    %v845 = vmul.f32 %v333, %v589
    %v846 = vmul.f32 %v334, %v590
    %v847 = vmul.f32 %v335, %v591
    %v848 = vmul.f32 %v336, %v592
    %v849 = vmul.f32 %v337, %v593
    %v850 = vmul.f32 %v338, %v594
    %v851 = vmul.f32 %v339, %v595
    %v852 = vmul.f32 %v340, %v596
    %v853 = vmul.f32 %v341, %v597
    %v854 = vmul.f32 %v342, %v598
    %v855 = vmul.f32 %v343, %v599
    %v856 = vmul.f32 %v344, %v600
    %v857 = vmul.f32 %v345, %v601
    %v858 = vmul.f32 %v346, %v602
    %v859 = vmul.f32 %v347, %v603
    %v860 = vmul.f32 %v348, %v604
    %v861 = vmul.f32 %v349, %v605
    %v862 = vmul.f32 %v350, %v606
    %v863 = vmul.f32 %v351, %v607
    %v864 = vmul.f32 %v352, %v608
    %v865 = vmul.f32 %v353, %v609
    %v866 = vmul.f32 %v354, %v610
    %v867 = vmul.f32 %v355, %v611
    %v868 = vmul.f32 %v356, %v612
    %v869 = vmul.f32 %v357, %v613
    %v870 = vmul.f32 %v358, %v614
    %v871 = vmul.f32 %v359, %v615
    %v872 = vmul.f32 %v360, %v616
    %v873 = vmul.f32 %v361, %v617
    %v874 = vmul.f32 %v362, %v618
    %v875 = vmul.f32 %v363, %v619
    %v876 = vmul.f32 %v364, %v620
    %v877 = vmul.f32 %v365, %v621
    %v878 = vmul.f32 %v366, %v622
    %v879 = vmul.f32 %v367, %v623
    %v880 = vmul.f32 %v368, %v624
    %v881 = vmul.f32 %v369, %v625
    %v882 = vmul.f32 %v370, %v626
    %v883 = vmul.f32 %v371, %v627
    %v884 = vmul.f32 %v372, %v628
    %v885 = vmul.f32 %v373, %v629
    %v886 = vmul.f32 %v374, %v630
    %v887 = vmul.f32 %v375, %v631
    %v888 = vmul.f32 %v376, %v632
    %v889 = vmul.f32 %v377, %v633
    %v890 = vmul.f32 %v378, %v634
    %v891 = vmul.f32 %v379, %v635
    %v892 = vmul.f32 %v380, %v636
    %v893 = vmul.f32 %v381, %v637
    %v894 = vmul.f32 %v382, %v638
    %v895 = vsel %vm53, %v767, 0.0
    %896 = vadd.xlane.f32.xlu0 %v895
    %v897 = vpop.xlane.xlu0 %896
    %v898 = vsel %vm53, %v768, 0.0
    %899 = vadd.xlane.f32.xlu0 %v898
    %v900 = vpop.xlane.xlu0 %899
    %v901 = vsel %vm53, %v769, 0.0
    %902 = vadd.xlane.f32.xlu0 %v901
    %v903 = vpop.xlane.xlu0 %902
    %v904 = vsel %vm53, %v770, 0.0
    %905 = vadd.xlane.f32.xlu0 %v904
    %v906 = vpop.xlane.xlu0 %905
    %v907 = vsel %vm53, %v771, 0.0
    %908 = vadd.xlane.f32.xlu0 %v907
    %v909 = vpop.xlane.xlu0 %908
    %v910 = vsel %vm53, %v772, 0.0
    %911 = vadd.xlane.f32.xlu0 %v910
    %v912 = vpop.xlane.xlu0 %911
    %v913 = vsel %vm53, %v773, 0.0
    %914 = vadd.xlane.f32.xlu0 %v913
    %v915 = vpop.xlane.xlu0 %914
    %v916 = vsel %vm53, %v774, 0.0
    %917 = vadd.xlane.f32.xlu0 %v916
    %v918 = vpop.xlane.xlu0 %917
    %v919 = vsel %vm53, %v775, 0.0
    %920 = vadd.xlane.f32.xlu0 %v919
    %v921 = vpop.xlane.xlu0 %920
    %v922 = vsel %vm53, %v776, 0.0
    %923 = vadd.xlane.f32.xlu0 %v922
    %v924 = vpop.xlane.xlu0 %923
    %v925 = vsel %vm53, %v777, 0.0
    %926 = vadd.xlane.f32.xlu0 %v925
    %v927 = vpop.xlane.xlu0 %926
    %v928 = vsel %vm53, %v778, 0.0
    %929 = vadd.xlane.f32.xlu0 %v928
    %v930 = vpop.xlane.xlu0 %929
    %v931 = vsel %vm53, %v779, 0.0
    %932 = vadd.xlane.f32.xlu0 %v931
    %v933 = vpop.xlane.xlu0 %932
    %v934 = vsel %vm53, %v780, 0.0
    %935 = vadd.xlane.f32.xlu0 %v934
    %v936 = vpop.xlane.xlu0 %935
    %v937 = vsel %vm53, %v781, 0.0
    %938 = vadd.xlane.f32.xlu0 %v937
    %v939 = vpop.xlane.xlu0 %938
    %v940 = vsel %vm53, %v782, 0.0
    %941 = vadd.xlane.f32.xlu0 %v940
    %v942 = vpop.xlane.xlu0 %941
    %v943 = vsel %vm53, %v783, 0.0
    %944 = vadd.xlane.f32.xlu0 %v943
    %v945 = vpop.xlane.xlu0 %944
    %v946 = vsel %vm53, %v784, 0.0
    %947 = vadd.xlane.f32.xlu0 %v946
    %v948 = vpop.xlane.xlu0 %947
    %v949 = vsel %vm53, %v785, 0.0
    %950 = vadd.xlane.f32.xlu0 %v949
    %v951 = vpop.xlane.xlu0 %950
    %v952 = vsel %vm53, %v786, 0.0
    %953 = vadd.xlane.f32.xlu0 %v952
    %v954 = vpop.xlane.xlu0 %953
    %v955 = vsel %vm53, %v787, 0.0
    %956 = vadd.xlane.f32.xlu0 %v955
    %v957 = vpop.xlane.xlu0 %956
    %v958 = vsel %vm53, %v788, 0.0
    %959 = vadd.xlane.f32.xlu0 %v958
    %v960 = vpop.xlane.xlu0 %959
    %v961 = vsel %vm53, %v789, 0.0
    %962 = vadd.xlane.f32.xlu0 %v961
    %v963 = vpop.xlane.xlu0 %962
    %v964 = vsel %vm53, %v790, 0.0
    %965 = vadd.xlane.f32.xlu0 %v964
    %v966 = vpop.xlane.xlu0 %965
    %v967 = vsel %vm53, %v791, 0.0
    %968 = vadd.xlane.f32.xlu0 %v967
    %v969 = vpop.xlane.xlu0 %968
    %v970 = vsel %vm53, %v792, 0.0
    %971 = vadd.xlane.f32.xlu0 %v970
    %v972 = vpop.xlane.xlu0 %971
    %v973 = vsel %vm53, %v793, 0.0
    %974 = vadd.xlane.f32.xlu0 %v973
    %v975 = vpop.xlane.xlu0 %974
    %v976 = vsel %vm53, %v794, 0.0
    %977 = vadd.xlane.f32.xlu0 %v976
    %v978 = vpop.xlane.xlu0 %977
    %v979 = vsel %vm53, %v795, 0.0
    %980 = vadd.xlane.f32.xlu0 %v979
    %v981 = vpop.xlane.xlu0 %980
    %v982 = vsel %vm53, %v796, 0.0
    %983 = vadd.xlane.f32.xlu0 %v982
    %v984 = vpop.xlane.xlu0 %983
    %v985 = vsel %vm53, %v797, 0.0
    %986 = vadd.xlane.f32.xlu0 %v985
    %v987 = vpop.xlane.xlu0 %986
    %v988 = vsel %vm53, %v798, 0.0
    %989 = vadd.xlane.f32.xlu0 %v988
    %v990 = vpop.xlane.xlu0 %989
    %v991 = vsel %vm53, %v799, 0.0
    %992 = vadd.xlane.f32.xlu0 %v991
    %v993 = vpop.xlane.xlu0 %992
    %v994 = vsel %vm53, %v800, 0.0
    %995 = vadd.xlane.f32.xlu0 %v994
    %v996 = vpop.xlane.xlu0 %995
    %v997 = vsel %vm53, %v801, 0.0
    %998 = vadd.xlane.f32.xlu0 %v997
    %v999 = vpop.xlane.xlu0 %998
    %v1000 = vsel %vm53, %v802, 0.0
    %1001 = vadd.xlane.f32.xlu0 %v1000
    %v1002 = vpop.xlane.xlu0 %1001
    %v1003 = vsel %vm53, %v803, 0.0
    %1004 = vadd.xlane.f32.xlu0 %v1003
    %v1005 = vpop.xlane.xlu0 %1004
    %v1006 = vsel %vm53, %v804, 0.0
    %1007 = vadd.xlane.f32.xlu0 %v1006
    %v1008 = vpop.xlane.xlu0 %1007
    %v1009 = vsel %vm53, %v805, 0.0
    %1010 = vadd.xlane.f32.xlu0 %v1009
    %v1011 = vpop.xlane.xlu0 %1010
    %v1012 = vsel %vm53, %v806, 0.0
    %1013 = vadd.xlane.f32.xlu0 %v1012
    %v1014 = vpop.xlane.xlu0 %1013
    %v1015 = vsel %vm53, %v807, 0.0
    %1016 = vadd.xlane.f32.xlu0 %v1015
    %v1017 = vpop.xlane.xlu0 %1016
    %v1018 = vsel %vm53, %v808, 0.0
    %1019 = vadd.xlane.f32.xlu0 %v1018
    %v1020 = vpop.xlane.xlu0 %1019
    %v1021 = vsel %vm53, %v809, 0.0
    %1022 = vadd.xlane.f32.xlu0 %v1021
    %v1023 = vpop.xlane.xlu0 %1022
    %v1024 = vsel %vm53, %v810, 0.0
    %1025 = vadd.xlane.f32.xlu0 %v1024
    %v1026 = vpop.xlane.xlu0 %1025
    %v1027 = vsel %vm53, %v811, 0.0
    %1028 = vadd.xlane.f32.xlu0 %v1027
    %v1029 = vpop.xlane.xlu0 %1028
    %v1030 = vsel %vm53, %v812, 0.0
    %1031 = vadd.xlane.f32.xlu0 %v1030
    %v1032 = vpop.xlane.xlu0 %1031
    %v1033 = vsel %vm53, %v813, 0.0
    %1034 = vadd.xlane.f32.xlu0 %v1033
    %v1035 = vpop.xlane.xlu0 %1034
    %v1036 = vsel %vm53, %v814, 0.0
    %1037 = vadd.xlane.f32.xlu0 %v1036
    %v1038 = vpop.xlane.xlu0 %1037
    %v1039 = vsel %vm53, %v815, 0.0
    %1040 = vadd.xlane.f32.xlu0 %v1039
    %v1041 = vpop.xlane.xlu0 %1040
    %v1042 = vsel %vm53, %v816, 0.0
    %1043 = vadd.xlane.f32.xlu0 %v1042
    %v1044 = vpop.xlane.xlu0 %1043
    %v1045 = vsel %vm53, %v817, 0.0
    %1046 = vadd.xlane.f32.xlu0 %v1045
    %v1047 = vpop.xlane.xlu0 %1046
    %v1048 = vsel %vm53, %v818, 0.0
    %1049 = vadd.xlane.f32.xlu0 %v1048
    %v1050 = vpop.xlane.xlu0 %1049
    %v1051 = vsel %vm53, %v819, 0.0
    %1052 = vadd.xlane.f32.xlu0 %v1051
    %v1053 = vpop.xlane.xlu0 %1052
    %v1054 = vsel %vm53, %v820, 0.0
    %1055 = vadd.xlane.f32.xlu0 %v1054
    %v1056 = vpop.xlane.xlu0 %1055
    %v1057 = vsel %vm53, %v821, 0.0
    %1058 = vadd.xlane.f32.xlu0 %v1057
    %v1059 = vpop.xlane.xlu0 %1058
    %v1060 = vsel %vm53, %v822, 0.0
    %1061 = vadd.xlane.f32.xlu0 %v1060
    %v1062 = vpop.xlane.xlu0 %1061
    %v1063 = vsel %vm53, %v823, 0.0
    %1064 = vadd.xlane.f32.xlu0 %v1063
    %v1065 = vpop.xlane.xlu0 %1064
    %v1066 = vsel %vm53, %v824, 0.0
    %1067 = vadd.xlane.f32.xlu0 %v1066
    %v1068 = vpop.xlane.xlu0 %1067
    %v1069 = vsel %vm53, %v825, 0.0
    %1070 = vadd.xlane.f32.xlu0 %v1069
    %v1071 = vpop.xlane.xlu0 %1070
    %v1072 = vsel %vm53, %v826, 0.0
    %1073 = vadd.xlane.f32.xlu0 %v1072
    %v1074 = vpop.xlane.xlu0 %1073
    %v1075 = vsel %vm53, %v827, 0.0
    %1076 = vadd.xlane.f32.xlu0 %v1075
    %v1077 = vpop.xlane.xlu0 %1076
    %v1078 = vsel %vm53, %v828, 0.0
    %1079 = vadd.xlane.f32.xlu0 %v1078
    %v1080 = vpop.xlane.xlu0 %1079
    %v1081 = vsel %vm53, %v829, 0.0
    %1082 = vadd.xlane.f32.xlu0 %v1081
    %v1083 = vpop.xlane.xlu0 %1082
    %v1084 = vsel %vm53, %v830, 0.0
    %1085 = vadd.xlane.f32.xlu0 %v1084
    %v1086 = vpop.xlane.xlu0 %1085
    %v1087 = vsel %vm53, %v831, 0.0
    %1088 = vadd.xlane.f32.xlu0 %v1087
    %v1089 = vpop.xlane.xlu0 %1088
    %v1090 = vsel %vm53, %v832, 0.0
    %1091 = vadd.xlane.f32.xlu0 %v1090
    %v1092 = vpop.xlane.xlu0 %1091
    %v1093 = vsel %vm53, %v833, 0.0
    %1094 = vadd.xlane.f32.xlu0 %v1093
    %v1095 = vpop.xlane.xlu0 %1094
    %v1096 = vsel %vm53, %v834, 0.0
    %1097 = vadd.xlane.f32.xlu0 %v1096
    %v1098 = vpop.xlane.xlu0 %1097
    %v1099 = vsel %vm53, %v835, 0.0
    %1100 = vadd.xlane.f32.xlu0 %v1099
    %v1101 = vpop.xlane.xlu0 %1100
    %v1102 = vsel %vm53, %v836, 0.0
    %1103 = vadd.xlane.f32.xlu0 %v1102
    %v1104 = vpop.xlane.xlu0 %1103
    %v1105 = vsel %vm53, %v837, 0.0
    %1106 = vadd.xlane.f32.xlu0 %v1105
    %v1107 = vpop.xlane.xlu0 %1106
    %v1108 = vsel %vm53, %v838, 0.0
    %1109 = vadd.xlane.f32.xlu0 %v1108
    %v1110 = vpop.xlane.xlu0 %1109
    %v1111 = vsel %vm53, %v839, 0.0
    %1112 = vadd.xlane.f32.xlu0 %v1111
    %v1113 = vpop.xlane.xlu0 %1112
    %v1114 = vsel %vm53, %v840, 0.0
    %1115 = vadd.xlane.f32.xlu0 %v1114
    %v1116 = vpop.xlane.xlu0 %1115
    %v1117 = vsel %vm53, %v841, 0.0
    %1118 = vadd.xlane.f32.xlu0 %v1117
    %v1119 = vpop.xlane.xlu0 %1118
    %v1120 = vsel %vm53, %v842, 0.0
    %1121 = vadd.xlane.f32.xlu0 %v1120
    %v1122 = vpop.xlane.xlu0 %1121
    %v1123 = vsel %vm53, %v843, 0.0
    %1124 = vadd.xlane.f32.xlu0 %v1123
    %v1125 = vpop.xlane.xlu0 %1124
    %v1126 = vsel %vm53, %v844, 0.0
    %1127 = vadd.xlane.f32.xlu0 %v1126
    %v1128 = vpop.xlane.xlu0 %1127
    %v1129 = vsel %vm53, %v845, 0.0
    %1130 = vadd.xlane.f32.xlu0 %v1129
    %v1131 = vpop.xlane.xlu0 %1130
    %v1132 = vsel %vm53, %v846, 0.0
    %1133 = vadd.xlane.f32.xlu0 %v1132
    %v1134 = vpop.xlane.xlu0 %1133
    %v1135 = vsel %vm53, %v847, 0.0
    %1136 = vadd.xlane.f32.xlu0 %v1135
    %v1137 = vpop.xlane.xlu0 %1136
    %v1138 = vsel %vm53, %v848, 0.0
    %1139 = vadd.xlane.f32.xlu0 %v1138
    %v1140 = vpop.xlane.xlu0 %1139
    %v1141 = vsel %vm53, %v849, 0.0
    %1142 = vadd.xlane.f32.xlu0 %v1141
    %v1143 = vpop.xlane.xlu0 %1142
    %v1144 = vsel %vm53, %v850, 0.0
    %1145 = vadd.xlane.f32.xlu0 %v1144
    %v1146 = vpop.xlane.xlu0 %1145
    %v1147 = vsel %vm53, %v851, 0.0
    %1148 = vadd.xlane.f32.xlu0 %v1147
    %v1149 = vpop.xlane.xlu0 %1148
    %v1150 = vsel %vm53, %v852, 0.0
    %1151 = vadd.xlane.f32.xlu0 %v1150
    %v1152 = vpop.xlane.xlu0 %1151
    %v1153 = vsel %vm53, %v853, 0.0
    %1154 = vadd.xlane.f32.xlu0 %v1153
    %v1155 = vpop.xlane.xlu0 %1154
    %v1156 = vsel %vm53, %v854, 0.0
    %1157 = vadd.xlane.f32.xlu0 %v1156
    %v1158 = vpop.xlane.xlu0 %1157
    %v1159 = vsel %vm53, %v855, 0.0
    %1160 = vadd.xlane.f32.xlu0 %v1159
    %v1161 = vpop.xlane.xlu0 %1160
    %v1162 = vsel %vm53, %v856, 0.0
    %1163 = vadd.xlane.f32.xlu0 %v1162
    %v1164 = vpop.xlane.xlu0 %1163
    %v1165 = vsel %vm53, %v857, 0.0
    %1166 = vadd.xlane.f32.xlu0 %v1165
    %v1167 = vpop.xlane.xlu0 %1166
    %v1168 = vsel %vm53, %v858, 0.0
    %1169 = vadd.xlane.f32.xlu0 %v1168
    %v1170 = vpop.xlane.xlu0 %1169
    %v1171 = vsel %vm53, %v859, 0.0
    %1172 = vadd.xlane.f32.xlu0 %v1171
    %v1173 = vpop.xlane.xlu0 %1172
    %v1174 = vsel %vm53, %v860, 0.0
    %1175 = vadd.xlane.f32.xlu0 %v1174
    %v1176 = vpop.xlane.xlu0 %1175
    %v1177 = vsel %vm53, %v861, 0.0
    %1178 = vadd.xlane.f32.xlu0 %v1177
    %v1179 = vpop.xlane.xlu0 %1178
    %v1180 = vsel %vm53, %v862, 0.0
    %1181 = vadd.xlane.f32.xlu0 %v1180
    %v1182 = vpop.xlane.xlu0 %1181
    %v1183 = vsel %vm53, %v863, 0.0
    %1184 = vadd.xlane.f32.xlu0 %v1183
    %v1185 = vpop.xlane.xlu0 %1184
    %v1186 = vsel %vm53, %v864, 0.0
    %1187 = vadd.xlane.f32.xlu0 %v1186
    %v1188 = vpop.xlane.xlu0 %1187
    %v1189 = vsel %vm53, %v865, 0.0
    %1190 = vadd.xlane.f32.xlu0 %v1189
    %v1191 = vpop.xlane.xlu0 %1190
    %v1192 = vsel %vm53, %v866, 0.0
    %1193 = vadd.xlane.f32.xlu0 %v1192
    %v1194 = vpop.xlane.xlu0 %1193
    %v1195 = vsel %vm53, %v867, 0.0
    %1196 = vadd.xlane.f32.xlu0 %v1195
    %v1197 = vpop.xlane.xlu0 %1196
    %v1198 = vsel %vm53, %v868, 0.0
    %1199 = vadd.xlane.f32.xlu0 %v1198
    %v1200 = vpop.xlane.xlu0 %1199
    %v1201 = vsel %vm53, %v869, 0.0
    %1202 = vadd.xlane.f32.xlu0 %v1201
    %v1203 = vpop.xlane.xlu0 %1202
    %v1204 = vsel %vm53, %v870, 0.0
    %1205 = vadd.xlane.f32.xlu0 %v1204
    %v1206 = vpop.xlane.xlu0 %1205
    %v1207 = vsel %vm53, %v871, 0.0
    %1208 = vadd.xlane.f32.xlu0 %v1207
    %v1209 = vpop.xlane.xlu0 %1208
    %v1210 = vsel %vm53, %v872, 0.0
    %1211 = vadd.xlane.f32.xlu0 %v1210
    %v1212 = vpop.xlane.xlu0 %1211
    %v1213 = vsel %vm53, %v873, 0.0
    %1214 = vadd.xlane.f32.xlu0 %v1213
    %v1215 = vpop.xlane.xlu0 %1214
    %v1216 = vsel %vm53, %v874, 0.0
    %1217 = vadd.xlane.f32.xlu0 %v1216
    %v1218 = vpop.xlane.xlu0 %1217
    %v1219 = vsel %vm53, %v875, 0.0
    %1220 = vadd.xlane.f32.xlu0 %v1219
    %v1221 = vpop.xlane.xlu0 %1220
    %v1222 = vsel %vm53, %v876, 0.0
    %1223 = vadd.xlane.f32.xlu0 %v1222
    %v1224 = vpop.xlane.xlu0 %1223
    %v1225 = vsel %vm53, %v877, 0.0
    %1226 = vadd.xlane.f32.xlu0 %v1225
    %v1227 = vpop.xlane.xlu0 %1226
    %v1228 = vsel %vm53, %v878, 0.0
    %1229 = vadd.xlane.f32.xlu0 %v1228
    %v1230 = vpop.xlane.xlu0 %1229
    %v1231 = vsel %vm53, %v879, 0.0
    %1232 = vadd.xlane.f32.xlu0 %v1231
    %v1233 = vpop.xlane.xlu0 %1232
    %v1234 = vsel %vm53, %v880, 0.0
    %1235 = vadd.xlane.f32.xlu0 %v1234
    %v1236 = vpop.xlane.xlu0 %1235
    %v1237 = vsel %vm53, %v881, 0.0
    %1238 = vadd.xlane.f32.xlu0 %v1237
    %v1239 = vpop.xlane.xlu0 %1238
    %v1240 = vsel %vm53, %v882, 0.0
    %1241 = vadd.xlane.f32.xlu0 %v1240
    %v1242 = vpop.xlane.xlu0 %1241
    %v1243 = vsel %vm53, %v883, 0.0
    %1244 = vadd.xlane.f32.xlu0 %v1243
    %v1245 = vpop.xlane.xlu0 %1244
    %v1246 = vsel %vm53, %v884, 0.0
    %1247 = vadd.xlane.f32.xlu0 %v1246
    %v1248 = vpop.xlane.xlu0 %1247
    %v1249 = vsel %vm53, %v885, 0.0
    %1250 = vadd.xlane.f32.xlu0 %v1249
    %v1251 = vpop.xlane.xlu0 %1250
    %v1252 = vsel %vm53, %v886, 0.0
    %1253 = vadd.xlane.f32.xlu0 %v1252
    %v1254 = vpop.xlane.xlu0 %1253
    %v1255 = vsel %vm53, %v887, 0.0
    %1256 = vadd.xlane.f32.xlu0 %v1255
    %v1257 = vpop.xlane.xlu0 %1256
    %v1258 = vsel %vm53, %v888, 0.0
    %1259 = vadd.xlane.f32.xlu0 %v1258
    %v1260 = vpop.xlane.xlu0 %1259
    %v1261 = vsel %vm53, %v889, 0.0
    %1262 = vadd.xlane.f32.xlu0 %v1261
    %v1263 = vpop.xlane.xlu0 %1262
    %v1264 = vsel %vm53, %v890, 0.0
    %1265 = vadd.xlane.f32.xlu0 %v1264
    %v1266 = vpop.xlane.xlu0 %1265
    %v1267 = vsel %vm53, %v891, 0.0
    %1268 = vadd.xlane.f32.xlu0 %v1267
    %v1269 = vpop.xlane.xlu0 %1268
    %v1270 = vsel %vm53, %v892, 0.0
    %1271 = vadd.xlane.f32.xlu0 %v1270
    %v1272 = vpop.xlane.xlu0 %1271
    %v1273 = vsel %vm53, %v893, 0.0
    %1274 = vadd.xlane.f32.xlu0 %v1273
    %v1275 = vpop.xlane.xlu0 %1274
    %v1276 = vsel %vm53, %v894, 0.0
    %1277 = vadd.xlane.f32.xlu0 %v1276
    %v1278 = vpop.xlane.xlu0 %1277
    %1280 = vset.pattern.permute.xlu0 0
    %1281 = vperm.xlu0 %1280, %v239
    %v1282 = vpop.permute.xlu0 %1281
    %1284 = vset.pattern.permute.xlu0 0
    %1285 = vperm.xlu0 %1284, %v240
    %v1286 = vpop.permute.xlu0 %1285
    %1288 = vset.pattern.permute.xlu0 0
    %1289 = vperm.xlu0 %1288, %v241
    %v1290 = vpop.permute.xlu0 %1289
    %1292 = vset.pattern.permute.xlu0 0
    %1293 = vperm.xlu0 %1292, %v242
    %v1294 = vpop.permute.xlu0 %1293
    %1296 = vset.pattern.permute.xlu0 0
    %1297 = vperm.xlu0 %1296, %v243
    %v1298 = vpop.permute.xlu0 %1297
    %1300 = vset.pattern.permute.xlu0 0
    %1301 = vperm.xlu0 %1300, %v244
    %v1302 = vpop.permute.xlu0 %1301
    %1304 = vset.pattern.permute.xlu0 0
    %1305 = vperm.xlu0 %1304, %v245
    %v1306 = vpop.permute.xlu0 %1305
    %1308 = vset.pattern.permute.xlu0 0
    %1309 = vperm.xlu0 %1308, %v246
    %v1310 = vpop.permute.xlu0 %1309
    %1312 = vset.pattern.permute.xlu0 0
    %1313 = vperm.xlu0 %1312, %v247
    %v1314 = vpop.permute.xlu0 %1313
    %1316 = vset.pattern.permute.xlu0 0
    %1317 = vperm.xlu0 %1316, %v248
    %v1318 = vpop.permute.xlu0 %1317
    %1320 = vset.pattern.permute.xlu0 0
    %1321 = vperm.xlu0 %1320, %v249
    %v1322 = vpop.permute.xlu0 %1321
    %1324 = vset.pattern.permute.xlu0 0
    %1325 = vperm.xlu0 %1324, %v250
    %v1326 = vpop.permute.xlu0 %1325
    %1328 = vset.pattern.permute.xlu0 0
    %1329 = vperm.xlu0 %1328, %v251
    %v1330 = vpop.permute.xlu0 %1329
    %1332 = vset.pattern.permute.xlu0 0
    %1333 = vperm.xlu0 %1332, %v252
    %v1334 = vpop.permute.xlu0 %1333
    %1336 = vset.pattern.permute.xlu0 0
    %1337 = vperm.xlu0 %1336, %v253
    %v1338 = vpop.permute.xlu0 %1337
    %1340 = vset.pattern.permute.xlu0 0
    %1341 = vperm.xlu0 %1340, %v254
    %v1342 = vpop.permute.xlu0 %1341
    %v1343 = vperm.slane %v1282, 0
    %v1344 = vperm.slane %v1282, 1
    %v1345 = vperm.slane %v1282, 2
    %v1346 = vperm.slane %v1282, 3
    %v1347 = vperm.slane %v1282, 4
    %v1348 = vperm.slane %v1282, 5
    %v1349 = vperm.slane %v1282, 6
    %v1350 = vperm.slane %v1282, 7
    %v1351 = vperm.slane %v1286, 0
    %v1352 = vperm.slane %v1286, 1
    %v1353 = vperm.slane %v1286, 2
    %v1354 = vperm.slane %v1286, 3
    %v1355 = vperm.slane %v1286, 4
    %v1356 = vperm.slane %v1286, 5
    %v1357 = vperm.slane %v1286, 6
    %v1358 = vperm.slane %v1286, 7
    %v1359 = vperm.slane %v1290, 0
    %v1360 = vperm.slane %v1290, 1
    %v1361 = vperm.slane %v1290, 2
    %v1362 = vperm.slane %v1290, 3
    %v1363 = vperm.slane %v1290, 4
    %v1364 = vperm.slane %v1290, 5
    %v1365 = vperm.slane %v1290, 6
    %v1366 = vperm.slane %v1290, 7
    %v1367 = vperm.slane %v1294, 0
    %v1368 = vperm.slane %v1294, 1
    %v1369 = vperm.slane %v1294, 2
    %v1370 = vperm.slane %v1294, 3
    %v1371 = vperm.slane %v1294, 4
    %v1372 = vperm.slane %v1294, 5
    %v1373 = vperm.slane %v1294, 6
    %v1374 = vperm.slane %v1294, 7
    %v1375 = vperm.slane %v1298, 0
    %v1376 = vperm.slane %v1298, 1
    %v1377 = vperm.slane %v1298, 2
    %v1378 = vperm.slane %v1298, 3
    %v1379 = vperm.slane %v1298, 4
    %v1380 = vperm.slane %v1298, 5
    %v1381 = vperm.slane %v1298, 6
    %v1382 = vperm.slane %v1298, 7
    %v1383 = vperm.slane %v1302, 0
    %v1384 = vperm.slane %v1302, 1
    %v1385 = vperm.slane %v1302, 2
    %v1386 = vperm.slane %v1302, 3
    %v1387 = vperm.slane %v1302, 4
    %v1388 = vperm.slane %v1302, 5
    %v1389 = vperm.slane %v1302, 6
    %v1390 = vperm.slane %v1302, 7
    %v1391 = vperm.slane %v1306, 0
    %v1392 = vperm.slane %v1306, 1
    %v1393 = vperm.slane %v1306, 2
    %v1394 = vperm.slane %v1306, 3
    %v1395 = vperm.slane %v1306, 4
    %v1396 = vperm.slane %v1306, 5
    %v1397 = vperm.slane %v1306, 6
    %v1398 = vperm.slane %v1306, 7
    %v1399 = vperm.slane %v1310, 0
    %v1400 = vperm.slane %v1310, 1
    %v1401 = vperm.slane %v1310, 2
    %v1402 = vperm.slane %v1310, 3
    %v1403 = vperm.slane %v1310, 4
    %v1404 = vperm.slane %v1310, 5
    %v1405 = vperm.slane %v1310, 6
    %v1406 = vperm.slane %v1310, 7
    %v1407 = vperm.slane %v1314, 0
    %v1408 = vperm.slane %v1314, 1
    %v1409 = vperm.slane %v1314, 2
    %v1410 = vperm.slane %v1314, 3
    %v1411 = vperm.slane %v1314, 4
    %v1412 = vperm.slane %v1314, 5
    %v1413 = vperm.slane %v1314, 6
    %v1414 = vperm.slane %v1314, 7
    %v1415 = vperm.slane %v1318, 0
    %v1416 = vperm.slane %v1318, 1
    %v1417 = vperm.slane %v1318, 2
    %v1418 = vperm.slane %v1318, 3
    %v1419 = vperm.slane %v1318, 4
    %v1420 = vperm.slane %v1318, 5
    %v1421 = vperm.slane %v1318, 6
    %v1422 = vperm.slane %v1318, 7
    %v1423 = vperm.slane %v1322, 0
    %v1424 = vperm.slane %v1322, 1
    %v1425 = vperm.slane %v1322, 2
    %v1426 = vperm.slane %v1322, 3
    %v1427 = vperm.slane %v1322, 4
    %v1428 = vperm.slane %v1322, 5
    %v1429 = vperm.slane %v1322, 6
    %v1430 = vperm.slane %v1322, 7
    %v1431 = vperm.slane %v1326, 0
    %v1432 = vperm.slane %v1326, 1
    %v1433 = vperm.slane %v1326, 2
    %v1434 = vperm.slane %v1326, 3
    %v1435 = vperm.slane %v1326, 4
    %v1436 = vperm.slane %v1326, 5
    %v1437 = vperm.slane %v1326, 6
    %v1438 = vperm.slane %v1326, 7
    %v1439 = vperm.slane %v1330, 0
    %v1440 = vperm.slane %v1330, 1
    %v1441 = vperm.slane %v1330, 2
    %v1442 = vperm.slane %v1330, 3
    %v1443 = vperm.slane %v1330, 4
    %v1444 = vperm.slane %v1330, 5
    %v1445 = vperm.slane %v1330, 6
    %v1446 = vperm.slane %v1330, 7
    %v1447 = vperm.slane %v1334, 0
    %v1448 = vperm.slane %v1334, 1
    %v1449 = vperm.slane %v1334, 2
    %v1450 = vperm.slane %v1334, 3
    %v1451 = vperm.slane %v1334, 4
    %v1452 = vperm.slane %v1334, 5
    %v1453 = vperm.slane %v1334, 6
    %v1454 = vperm.slane %v1334, 7
    %v1455 = vperm.slane %v1338, 0
    %v1456 = vperm.slane %v1338, 1
    %v1457 = vperm.slane %v1338, 2
    %v1458 = vperm.slane %v1338, 3
    %v1459 = vperm.slane %v1338, 4
    %v1460 = vperm.slane %v1338, 5
    %v1461 = vperm.slane %v1338, 6
    %v1462 = vperm.slane %v1338, 7
    %v1463 = vperm.slane %v1342, 0
    %v1464 = vperm.slane %v1342, 1
    %v1465 = vperm.slane %v1342, 2
    %v1466 = vperm.slane %v1342, 3
    %v1467 = vperm.slane %v1342, 4
    %v1468 = vperm.slane %v1342, 5
    %v1469 = vperm.slane %v1342, 6
    %v1470 = vperm.slane %v1342, 7
    %v1599 = vadd.f32 %v897, %v1343
    %v1600 = vadd.f32 %v900, %v1344
    %v1601 = vadd.f32 %v903, %v1345
    %v1602 = vadd.f32 %v906, %v1346
    %v1603 = vadd.f32 %v909, %v1347
    %v1604 = vadd.f32 %v912, %v1348
    %v1605 = vadd.f32 %v915, %v1349
    %v1606 = vadd.f32 %v918, %v1350
    %v1607 = vadd.f32 %v921, %v1351
    %v1608 = vadd.f32 %v924, %v1352
    %v1609 = vadd.f32 %v927, %v1353
    %v1610 = vadd.f32 %v930, %v1354
    %v1611 = vadd.f32 %v933, %v1355
    %v1612 = vadd.f32 %v936, %v1356
    %v1613 = vadd.f32 %v939, %v1357
    %v1614 = vadd.f32 %v942, %v1358
    %v1615 = vadd.f32 %v945, %v1359
    %v1616 = vadd.f32 %v948, %v1360
    %v1617 = vadd.f32 %v951, %v1361
    %v1618 = vadd.f32 %v954, %v1362
    %v1619 = vadd.f32 %v957, %v1363
    %v1620 = vadd.f32 %v960, %v1364
    %v1621 = vadd.f32 %v963, %v1365
    %v1622 = vadd.f32 %v966, %v1366
    %v1623 = vadd.f32 %v969, %v1367
    %v1624 = vadd.f32 %v972, %v1368
    %v1625 = vadd.f32 %v975, %v1369
    %v1626 = vadd.f32 %v978, %v1370
    %v1627 = vadd.f32 %v981, %v1371
    %v1628 = vadd.f32 %v984, %v1372
    %v1629 = vadd.f32 %v987, %v1373
    %v1630 = vadd.f32 %v990, %v1374
    %v1631 = vadd.f32 %v993, %v1375
    %v1632 = vadd.f32 %v996, %v1376
    %v1633 = vadd.f32 %v999, %v1377
    %v1634 = vadd.f32 %v1002, %v1378
    %v1635 = vadd.f32 %v1005, %v1379
    %v1636 = vadd.f32 %v1008, %v1380
    %v1637 = vadd.f32 %v1011, %v1381
    %v1638 = vadd.f32 %v1014, %v1382
    %v1639 = vadd.f32 %v1017, %v1383
    %v1640 = vadd.f32 %v1020, %v1384
    %v1641 = vadd.f32 %v1023, %v1385
    %v1642 = vadd.f32 %v1026, %v1386
    %v1643 = vadd.f32 %v1029, %v1387
    %v1644 = vadd.f32 %v1032, %v1388
    %v1645 = vadd.f32 %v1035, %v1389
    %v1646 = vadd.f32 %v1038, %v1390
    %v1647 = vadd.f32 %v1041, %v1391
    %v1648 = vadd.f32 %v1044, %v1392
    %v1649 = vadd.f32 %v1047, %v1393
    %v1650 = vadd.f32 %v1050, %v1394
    %v1651 = vadd.f32 %v1053, %v1395
    %v1652 = vadd.f32 %v1056, %v1396
    %v1653 = vadd.f32 %v1059, %v1397
    %v1654 = vadd.f32 %v1062, %v1398
    %v1655 = vadd.f32 %v1065, %v1399
    %v1656 = vadd.f32 %v1068, %v1400
    %v1657 = vadd.f32 %v1071, %v1401
    %v1658 = vadd.f32 %v1074, %v1402
    %v1659 = vadd.f32 %v1077, %v1403
    %v1660 = vadd.f32 %v1080, %v1404
    %v1661 = vadd.f32 %v1083, %v1405
    %v1662 = vadd.f32 %v1086, %v1406
    %v1663 = vadd.f32 %v1089, %v1407
    %v1664 = vadd.f32 %v1092, %v1408
    %v1665 = vadd.f32 %v1095, %v1409
    %v1666 = vadd.f32 %v1098, %v1410
    %v1667 = vadd.f32 %v1101, %v1411
    %v1668 = vadd.f32 %v1104, %v1412
    %v1669 = vadd.f32 %v1107, %v1413
    %v1670 = vadd.f32 %v1110, %v1414
    %v1671 = vadd.f32 %v1113, %v1415
    %v1672 = vadd.f32 %v1116, %v1416
    %v1673 = vadd.f32 %v1119, %v1417
    %v1674 = vadd.f32 %v1122, %v1418
    %v1675 = vadd.f32 %v1125, %v1419
    %v1676 = vadd.f32 %v1128, %v1420
    %v1677 = vadd.f32 %v1131, %v1421
    %v1678 = vadd.f32 %v1134, %v1422
    %v1679 = vadd.f32 %v1137, %v1423
    %v1680 = vadd.f32 %v1140, %v1424
    %v1681 = vadd.f32 %v1143, %v1425
    %v1682 = vadd.f32 %v1146, %v1426
    %v1683 = vadd.f32 %v1149, %v1427
    %v1684 = vadd.f32 %v1152, %v1428
    %v1685 = vadd.f32 %v1155, %v1429
    %v1686 = vadd.f32 %v1158, %v1430
    %v1687 = vadd.f32 %v1161, %v1431
    %v1688 = vadd.f32 %v1164, %v1432
    %v1689 = vadd.f32 %v1167, %v1433
    %v1690 = vadd.f32 %v1170, %v1434
    %v1691 = vadd.f32 %v1173, %v1435
    %v1692 = vadd.f32 %v1176, %v1436
    %v1693 = vadd.f32 %v1179, %v1437
    %v1694 = vadd.f32 %v1182, %v1438
    %v1695 = vadd.f32 %v1185, %v1439
    %v1696 = vadd.f32 %v1188, %v1440
    %v1697 = vadd.f32 %v1191, %v1441
    %v1698 = vadd.f32 %v1194, %v1442
    %v1699 = vadd.f32 %v1197, %v1443
    %v1700 = vadd.f32 %v1200, %v1444
    %v1701 = vadd.f32 %v1203, %v1445
    %v1702 = vadd.f32 %v1206, %v1446
    %v1703 = vadd.f32 %v1209, %v1447
    %v1704 = vadd.f32 %v1212, %v1448
    %v1705 = vadd.f32 %v1215, %v1449
    %v1706 = vadd.f32 %v1218, %v1450
    %v1707 = vadd.f32 %v1221, %v1451
    %v1708 = vadd.f32 %v1224, %v1452
    %v1709 = vadd.f32 %v1227, %v1453
    %v1710 = vadd.f32 %v1230, %v1454
    %v1711 = vadd.f32 %v1233, %v1455
    %v1712 = vadd.f32 %v1236, %v1456
    %v1713 = vadd.f32 %v1239, %v1457
    %v1714 = vadd.f32 %v1242, %v1458
    %v1715 = vadd.f32 %v1245, %v1459
    %v1716 = vadd.f32 %v1248, %v1460
    %v1717 = vadd.f32 %v1251, %v1461
    %v1718 = vadd.f32 %v1254, %v1462
    %v1719 = vadd.f32 %v1257, %v1463
    %v1720 = vadd.f32 %v1260, %v1464
    %v1721 = vadd.f32 %v1263, %v1465
    %v1722 = vadd.f32 %v1266, %v1466
    %v1723 = vadd.f32 %v1269, %v1467
    %v1724 = vadd.f32 %v1272, %v1468
    %v1725 = vadd.f32 %v1275, %v1469
    %v1726 = vadd.f32 %v1278, %v1470
    %v1727 = vld [vmem:[%s2] sm:$0xff]
    %v1728 = vld [vmem:[%s2 + $0x8] sm:$0xff]
    %v1729 = vld [vmem:[%s2 + $0x10] sm:$0xff]
    %v1730 = vld [vmem:[%s2 + $0x18] sm:$0xff]
    %v1731 = vld [vmem:[%s2 + $0x20] sm:$0xff]
    %v1732 = vld [vmem:[%s2 + $0x28] sm:$0xff]
    %v1733 = vld [vmem:[%s2 + $0x30] sm:$0xff]
    %v1734 = vld [vmem:[%s2 + $0x38] sm:$0xff]
    %v1735 = vld [vmem:[%s2 + $0x40] sm:$0xff]
    %v1736 = vld [vmem:[%s2 + $0x48] sm:$0xff]
    %v1737 = vld [vmem:[%s2 + $0x50] sm:$0xff]
    %v1738 = vld [vmem:[%s2 + $0x58] sm:$0xff]
    %v1739 = vld [vmem:[%s2 + $0x60] sm:$0xff]
    %v1740 = vld [vmem:[%s2 + $0x68] sm:$0xff]
    %v1741 = vld [vmem:[%s2 + $0x70] sm:$0xff]
    %v1742 = vld [vmem:[%s2 + $0x78] sm:$0xff]
    %v1759 = vperm.slane %v1727, 0
    %v1760 = vlaneseq
    %v1761 = vshrl.u32 %v1760, 7
    %1763 = vset.pattern.permute.xlu0 %v1761
    %1764 = vperm.xlu0 %1763, %v1759
    %v1765 = vpop.permute.xlu0 %1764
    %v1766 = vperm.slane %v1727, 1
    %v1767 = vlaneseq
    %v1768 = vshrl.u32 %v1767, 7
    %1770 = vset.pattern.permute.xlu0 %v1768
    %1771 = vperm.xlu0 %1770, %v1766
    %v1772 = vpop.permute.xlu0 %1771
    %v1773 = vperm.slane %v1727, 2
    %v1774 = vlaneseq
    %v1775 = vshrl.u32 %v1774, 7
    %1777 = vset.pattern.permute.xlu0 %v1775
    %1778 = vperm.xlu0 %1777, %v1773
    %v1779 = vpop.permute.xlu0 %1778
    %v1780 = vperm.slane %v1727, 3
    %v1781 = vlaneseq
    %v1782 = vshrl.u32 %v1781, 7
    %1784 = vset.pattern.permute.xlu0 %v1782
    %1785 = vperm.xlu0 %1784, %v1780
    %v1786 = vpop.permute.xlu0 %1785
    %v1787 = vperm.slane %v1727, 4
    %v1788 = vlaneseq
    %v1789 = vshrl.u32 %v1788, 7
    %1791 = vset.pattern.permute.xlu0 %v1789
    %1792 = vperm.xlu0 %1791, %v1787
    %v1793 = vpop.permute.xlu0 %1792
    %v1794 = vperm.slane %v1727, 5
    %v1795 = vlaneseq
    %v1796 = vshrl.u32 %v1795, 7
    %1798 = vset.pattern.permute.xlu0 %v1796
    %1799 = vperm.xlu0 %1798, %v1794
    %v1800 = vpop.permute.xlu0 %1799
    %v1801 = vperm.slane %v1727, 6
    %v1802 = vlaneseq
    %v1803 = vshrl.u32 %v1802, 7
    %1805 = vset.pattern.permute.xlu0 %v1803
    %1806 = vperm.xlu0 %1805, %v1801
    %v1807 = vpop.permute.xlu0 %1806
    %v1808 = vperm.slane %v1727, 7
    %v1809 = vlaneseq
    %v1810 = vshrl.u32 %v1809, 7
    %1812 = vset.pattern.permute.xlu0 %v1810
    %1813 = vperm.xlu0 %1812, %v1808
    %v1814 = vpop.permute.xlu0 %1813
    %v1815 = vperm.slane %v1728, 0
    %v1816 = vlaneseq
    %v1817 = vshrl.u32 %v1816, 7
    %1819 = vset.pattern.permute.xlu0 %v1817
    %1820 = vperm.xlu0 %1819, %v1815
    %v1821 = vpop.permute.xlu0 %1820
    %v1822 = vperm.slane %v1728, 1
    %v1823 = vlaneseq
    %v1824 = vshrl.u32 %v1823, 7
    %1826 = vset.pattern.permute.xlu0 %v1824
    %1827 = vperm.xlu0 %1826, %v1822
    %v1828 = vpop.permute.xlu0 %1827
    %v1829 = vperm.slane %v1728, 2
    %v1830 = vlaneseq
    %v1831 = vshrl.u32 %v1830, 7
    %1833 = vset.pattern.permute.xlu0 %v1831
    %1834 = vperm.xlu0 %1833, %v1829
    %v1835 = vpop.permute.xlu0 %1834
    %v1836 = vperm.slane %v1728, 3
    %v1837 = vlaneseq
    %v1838 = vshrl.u32 %v1837, 7
    %1840 = vset.pattern.permute.xlu0 %v1838
    %1841 = vperm.xlu0 %1840, %v1836
    %v1842 = vpop.permute.xlu0 %1841
    %v1843 = vperm.slane %v1728, 4
    %v1844 = vlaneseq
    %v1845 = vshrl.u32 %v1844, 7
    %1847 = vset.pattern.permute.xlu0 %v1845
    %1848 = vperm.xlu0 %1847, %v1843
    %v1849 = vpop.permute.xlu0 %1848
    %v1850 = vperm.slane %v1728, 5
    %v1851 = vlaneseq
    %v1852 = vshrl.u32 %v1851, 7
    %1854 = vset.pattern.permute.xlu0 %v1852
    %1855 = vperm.xlu0 %1854, %v1850
    %v1856 = vpop.permute.xlu0 %1855
    %v1857 = vperm.slane %v1728, 6
    %v1858 = vlaneseq
    %v1859 = vshrl.u32 %v1858, 7
    %1861 = vset.pattern.permute.xlu0 %v1859
    %1862 = vperm.xlu0 %1861, %v1857
    %v1863 = vpop.permute.xlu0 %1862
    %v1864 = vperm.slane %v1728, 7
    %v1865 = vlaneseq
    %v1866 = vshrl.u32 %v1865, 7
    %1868 = vset.pattern.permute.xlu0 %v1866
    %1869 = vperm.xlu0 %1868, %v1864
    %v1870 = vpop.permute.xlu0 %1869
    %v1871 = vperm.slane %v1729, 0
    %v1872 = vlaneseq
    %v1873 = vshrl.u32 %v1872, 7
    %1875 = vset.pattern.permute.xlu0 %v1873
    %1876 = vperm.xlu0 %1875, %v1871
    %v1877 = vpop.permute.xlu0 %1876
    %v1878 = vperm.slane %v1729, 1
    %v1879 = vlaneseq
    %v1880 = vshrl.u32 %v1879, 7
    %1882 = vset.pattern.permute.xlu0 %v1880
    %1883 = vperm.xlu0 %1882, %v1878
    %v1884 = vpop.permute.xlu0 %1883
    %v1885 = vperm.slane %v1729, 2
    %v1886 = vlaneseq
    %v1887 = vshrl.u32 %v1886, 7
    %1889 = vset.pattern.permute.xlu0 %v1887
    %1890 = vperm.xlu0 %1889, %v1885
    %v1891 = vpop.permute.xlu0 %1890
    %v1892 = vperm.slane %v1729, 3
    %v1893 = vlaneseq
    %v1894 = vshrl.u32 %v1893, 7
    %1896 = vset.pattern.permute.xlu0 %v1894
    %1897 = vperm.xlu0 %1896, %v1892
    %v1898 = vpop.permute.xlu0 %1897
    %v1899 = vperm.slane %v1729, 4
    %v1900 = vlaneseq
    %v1901 = vshrl.u32 %v1900, 7
    %1903 = vset.pattern.permute.xlu0 %v1901
    %1904 = vperm.xlu0 %1903, %v1899
    %v1905 = vpop.permute.xlu0 %1904
    %v1906 = vperm.slane %v1729, 5
    %v1907 = vlaneseq
    %v1908 = vshrl.u32 %v1907, 7
    %1910 = vset.pattern.permute.xlu0 %v1908
    %1911 = vperm.xlu0 %1910, %v1906
    %v1912 = vpop.permute.xlu0 %1911
    %v1913 = vperm.slane %v1729, 6
    %v1914 = vlaneseq
    %v1915 = vshrl.u32 %v1914, 7
    %1917 = vset.pattern.permute.xlu0 %v1915
    %1918 = vperm.xlu0 %1917, %v1913
    %v1919 = vpop.permute.xlu0 %1918
    %v1920 = vperm.slane %v1729, 7
    %v1921 = vlaneseq
    %v1922 = vshrl.u32 %v1921, 7
    %1924 = vset.pattern.permute.xlu0 %v1922
    %1925 = vperm.xlu0 %1924, %v1920
    %v1926 = vpop.permute.xlu0 %1925
    %v1927 = vperm.slane %v1730, 0
    %v1928 = vlaneseq
    %v1929 = vshrl.u32 %v1928, 7
    %1931 = vset.pattern.permute.xlu0 %v1929
    %1932 = vperm.xlu0 %1931, %v1927
    %v1933 = vpop.permute.xlu0 %1932
    %v1934 = vperm.slane %v1730, 1
    %v1935 = vlaneseq
    %v1936 = vshrl.u32 %v1935, 7
    %1938 = vset.pattern.permute.xlu0 %v1936
    %1939 = vperm.xlu0 %1938, %v1934
    %v1940 = vpop.permute.xlu0 %1939
    %v1941 = vperm.slane %v1730, 2
    %v1942 = vlaneseq
    %v1943 = vshrl.u32 %v1942, 7
    %1945 = vset.pattern.permute.xlu0 %v1943
    %1946 = vperm.xlu0 %1945, %v1941
    %v1947 = vpop.permute.xlu0 %1946
    %v1948 = vperm.slane %v1730, 3
    %v1949 = vlaneseq
    %v1950 = vshrl.u32 %v1949, 7
    %1952 = vset.pattern.permute.xlu0 %v1950
    %1953 = vperm.xlu0 %1952, %v1948
    %v1954 = vpop.permute.xlu0 %1953
    %v1955 = vperm.slane %v1730, 4
    %v1956 = vlaneseq
    %v1957 = vshrl.u32 %v1956, 7
    %1959 = vset.pattern.permute.xlu0 %v1957
    %1960 = vperm.xlu0 %1959, %v1955
    %v1961 = vpop.permute.xlu0 %1960
    %v1962 = vperm.slane %v1730, 5
    %v1963 = vlaneseq
    %v1964 = vshrl.u32 %v1963, 7
    %1966 = vset.pattern.permute.xlu0 %v1964
    %1967 = vperm.xlu0 %1966, %v1962
    %v1968 = vpop.permute.xlu0 %1967
    %v1969 = vperm.slane %v1730, 6
    %v1970 = vlaneseq
    %v1971 = vshrl.u32 %v1970, 7
    %1973 = vset.pattern.permute.xlu0 %v1971
    %1974 = vperm.xlu0 %1973, %v1969
    %v1975 = vpop.permute.xlu0 %1974
    %v1976 = vperm.slane %v1730, 7
    %v1977 = vlaneseq
    %v1978 = vshrl.u32 %v1977, 7
    %1980 = vset.pattern.permute.xlu0 %v1978
    %1981 = vperm.xlu0 %1980, %v1976
    %v1982 = vpop.permute.xlu0 %1981
    %v1983 = vperm.slane %v1731, 0
    %v1984 = vlaneseq
    %v1985 = vshrl.u32 %v1984, 7
    %1987 = vset.pattern.permute.xlu0 %v1985
    %1988 = vperm.xlu0 %1987, %v1983
    %v1989 = vpop.permute.xlu0 %1988
    %v1990 = vperm.slane %v1731, 1
    %v1991 = vlaneseq
    %v1992 = vshrl.u32 %v1991, 7
    %1994 = vset.pattern.permute.xlu0 %v1992
    %1995 = vperm.xlu0 %1994, %v1990
    %v1996 = vpop.permute.xlu0 %1995
    %v1997 = vperm.slane %v1731, 2
    %v1998 = vlaneseq
    %v1999 = vshrl.u32 %v1998, 7
    %2001 = vset.pattern.permute.xlu0 %v1999
    %2002 = vperm.xlu0 %2001, %v1997
    %v2003 = vpop.permute.xlu0 %2002
    %v2004 = vperm.slane %v1731, 3
    %v2005 = vlaneseq
    %v2006 = vshrl.u32 %v2005, 7
    %2008 = vset.pattern.permute.xlu0 %v2006
    %2009 = vperm.xlu0 %2008, %v2004
    %v2010 = vpop.permute.xlu0 %2009
    %v2011 = vperm.slane %v1731, 4
    %v2012 = vlaneseq
    %v2013 = vshrl.u32 %v2012, 7
    %2015 = vset.pattern.permute.xlu0 %v2013
    %2016 = vperm.xlu0 %2015, %v2011
    %v2017 = vpop.permute.xlu0 %2016
    %v2018 = vperm.slane %v1731, 5
    %v2019 = vlaneseq
    %v2020 = vshrl.u32 %v2019, 7
    %2022 = vset.pattern.permute.xlu0 %v2020
    %2023 = vperm.xlu0 %2022, %v2018
    %v2024 = vpop.permute.xlu0 %2023
    %v2025 = vperm.slane %v1731, 6
    %v2026 = vlaneseq
    %v2027 = vshrl.u32 %v2026, 7
    %2029 = vset.pattern.permute.xlu0 %v2027
    %2030 = vperm.xlu0 %2029, %v2025
    %v2031 = vpop.permute.xlu0 %2030
    %v2032 = vperm.slane %v1731, 7
    %v2033 = vlaneseq
    %v2034 = vshrl.u32 %v2033, 7
    %2036 = vset.pattern.permute.xlu0 %v2034
    %2037 = vperm.xlu0 %2036, %v2032
    %v2038 = vpop.permute.xlu0 %2037
    %v2039 = vperm.slane %v1732, 0
    %v2040 = vlaneseq
    %v2041 = vshrl.u32 %v2040, 7
    %2043 = vset.pattern.permute.xlu0 %v2041
    %2044 = vperm.xlu0 %2043, %v2039
    %v2045 = vpop.permute.xlu0 %2044
    %v2046 = vperm.slane %v1732, 1
    %v2047 = vlaneseq
    %v2048 = vshrl.u32 %v2047, 7
    %2050 = vset.pattern.permute.xlu0 %v2048
    %2051 = vperm.xlu0 %2050, %v2046
    %v2052 = vpop.permute.xlu0 %2051
    %v2053 = vperm.slane %v1732, 2
    %v2054 = vlaneseq
    %v2055 = vshrl.u32 %v2054, 7
    %2057 = vset.pattern.permute.xlu0 %v2055
    %2058 = vperm.xlu0 %2057, %v2053
    %v2059 = vpop.permute.xlu0 %2058
    %v2060 = vperm.slane %v1732, 3
    %v2061 = vlaneseq
    %v2062 = vshrl.u32 %v2061, 7
    %2064 = vset.pattern.permute.xlu0 %v2062
    %2065 = vperm.xlu0 %2064, %v2060
    %v2066 = vpop.permute.xlu0 %2065
    %v2067 = vperm.slane %v1732, 4
    %v2068 = vlaneseq
    %v2069 = vshrl.u32 %v2068, 7
    %2071 = vset.pattern.permute.xlu0 %v2069
    %2072 = vperm.xlu0 %2071, %v2067
    %v2073 = vpop.permute.xlu0 %2072
    %v2074 = vperm.slane %v1732, 5
    %v2075 = vlaneseq
    %v2076 = vshrl.u32 %v2075, 7
    %2078 = vset.pattern.permute.xlu0 %v2076
    %2079 = vperm.xlu0 %2078, %v2074
    %v2080 = vpop.permute.xlu0 %2079
    %v2081 = vperm.slane %v1732, 6
    %v2082 = vlaneseq
    %v2083 = vshrl.u32 %v2082, 7
    %2085 = vset.pattern.permute.xlu0 %v2083
    %2086 = vperm.xlu0 %2085, %v2081
    %v2087 = vpop.permute.xlu0 %2086
    %v2088 = vperm.slane %v1732, 7
    %v2089 = vlaneseq
    %v2090 = vshrl.u32 %v2089, 7
    %2092 = vset.pattern.permute.xlu0 %v2090
    %2093 = vperm.xlu0 %2092, %v2088
    %v2094 = vpop.permute.xlu0 %2093
    %v2095 = vperm.slane %v1733, 0
    %v2096 = vlaneseq
    %v2097 = vshrl.u32 %v2096, 7
    %2099 = vset.pattern.permute.xlu0 %v2097
    %2100 = vperm.xlu0 %2099, %v2095
    %v2101 = vpop.permute.xlu0 %2100
    %v2102 = vperm.slane %v1733, 1
    %v2103 = vlaneseq
    %v2104 = vshrl.u32 %v2103, 7
    %2106 = vset.pattern.permute.xlu0 %v2104
    %2107 = vperm.xlu0 %2106, %v2102
    %v2108 = vpop.permute.xlu0 %2107
    %v2109 = vperm.slane %v1733, 2
    %v2110 = vlaneseq
    %v2111 = vshrl.u32 %v2110, 7
    %2113 = vset.pattern.permute.xlu0 %v2111
    %2114 = vperm.xlu0 %2113, %v2109
    %v2115 = vpop.permute.xlu0 %2114
    %v2116 = vperm.slane %v1733, 3
    %v2117 = vlaneseq
    %v2118 = vshrl.u32 %v2117, 7
    %2120 = vset.pattern.permute.xlu0 %v2118
    %2121 = vperm.xlu0 %2120, %v2116
    %v2122 = vpop.permute.xlu0 %2121
    %v2123 = vperm.slane %v1733, 4
    %v2124 = vlaneseq
    %v2125 = vshrl.u32 %v2124, 7
    %2127 = vset.pattern.permute.xlu0 %v2125
    %2128 = vperm.xlu0 %2127, %v2123
    %v2129 = vpop.permute.xlu0 %2128
    %v2130 = vperm.slane %v1733, 5
    %v2131 = vlaneseq
    %v2132 = vshrl.u32 %v2131, 7
    %2134 = vset.pattern.permute.xlu0 %v2132
    %2135 = vperm.xlu0 %2134, %v2130
    %v2136 = vpop.permute.xlu0 %2135
    %v2137 = vperm.slane %v1733, 6
    %v2138 = vlaneseq
    %v2139 = vshrl.u32 %v2138, 7
    %2141 = vset.pattern.permute.xlu0 %v2139
    %2142 = vperm.xlu0 %2141, %v2137
    %v2143 = vpop.permute.xlu0 %2142
    %v2144 = vperm.slane %v1733, 7
    %v2145 = vlaneseq
    %v2146 = vshrl.u32 %v2145, 7
    %2148 = vset.pattern.permute.xlu0 %v2146
    %2149 = vperm.xlu0 %2148, %v2144
    %v2150 = vpop.permute.xlu0 %2149
    %v2151 = vperm.slane %v1734, 0
    %v2152 = vlaneseq
    %v2153 = vshrl.u32 %v2152, 7
    %2155 = vset.pattern.permute.xlu0 %v2153
    %2156 = vperm.xlu0 %2155, %v2151
    %v2157 = vpop.permute.xlu0 %2156
    %v2158 = vperm.slane %v1734, 1
    %v2159 = vlaneseq
    %v2160 = vshrl.u32 %v2159, 7
    %2162 = vset.pattern.permute.xlu0 %v2160
    %2163 = vperm.xlu0 %2162, %v2158
    %v2164 = vpop.permute.xlu0 %2163
    %v2165 = vperm.slane %v1734, 2
    %v2166 = vlaneseq
    %v2167 = vshrl.u32 %v2166, 7
    %2169 = vset.pattern.permute.xlu0 %v2167
    %2170 = vperm.xlu0 %2169, %v2165
    %v2171 = vpop.permute.xlu0 %2170
    %v2172 = vperm.slane %v1734, 3
    %v2173 = vlaneseq
    %v2174 = vshrl.u32 %v2173, 7
    %2176 = vset.pattern.permute.xlu0 %v2174
    %2177 = vperm.xlu0 %2176, %v2172
    %v2178 = vpop.permute.xlu0 %2177
    %v2179 = vperm.slane %v1734, 4
    %v2180 = vlaneseq
    %v2181 = vshrl.u32 %v2180, 7
    %2183 = vset.pattern.permute.xlu0 %v2181
    %2184 = vperm.xlu0 %2183, %v2179
    %v2185 = vpop.permute.xlu0 %2184
    %v2186 = vperm.slane %v1734, 5
    %v2187 = vlaneseq
    %v2188 = vshrl.u32 %v2187, 7
    %2190 = vset.pattern.permute.xlu0 %v2188
    %2191 = vperm.xlu0 %2190, %v2186
    %v2192 = vpop.permute.xlu0 %2191
    %v2193 = vperm.slane %v1734, 6
    %v2194 = vlaneseq
    %v2195 = vshrl.u32 %v2194, 7
    %2197 = vset.pattern.permute.xlu0 %v2195
    %2198 = vperm.xlu0 %2197, %v2193
    %v2199 = vpop.permute.xlu0 %2198
    %v2200 = vperm.slane %v1734, 7
    %v2201 = vlaneseq
    %v2202 = vshrl.u32 %v2201, 7
    %2204 = vset.pattern.permute.xlu0 %v2202
    %2205 = vperm.xlu0 %2204, %v2200
    %v2206 = vpop.permute.xlu0 %2205
    %v2207 = vperm.slane %v1735, 0
    %v2208 = vlaneseq
    %v2209 = vshrl.u32 %v2208, 7
    %2211 = vset.pattern.permute.xlu0 %v2209
    %2212 = vperm.xlu0 %2211, %v2207
    %v2213 = vpop.permute.xlu0 %2212
    %v2214 = vperm.slane %v1735, 1
    %v2215 = vlaneseq
    %v2216 = vshrl.u32 %v2215, 7
    %2218 = vset.pattern.permute.xlu0 %v2216
    %2219 = vperm.xlu0 %2218, %v2214
    %v2220 = vpop.permute.xlu0 %2219
    %v2221 = vperm.slane %v1735, 2
    %v2222 = vlaneseq
    %v2223 = vshrl.u32 %v2222, 7
    %2225 = vset.pattern.permute.xlu0 %v2223
    %2226 = vperm.xlu0 %2225, %v2221
    %v2227 = vpop.permute.xlu0 %2226
    %v2228 = vperm.slane %v1735, 3
    %v2229 = vlaneseq
    %v2230 = vshrl.u32 %v2229, 7
    %2232 = vset.pattern.permute.xlu0 %v2230
    %2233 = vperm.xlu0 %2232, %v2228
    %v2234 = vpop.permute.xlu0 %2233
    %v2235 = vperm.slane %v1735, 4
    %v2236 = vlaneseq
    %v2237 = vshrl.u32 %v2236, 7
    %2239 = vset.pattern.permute.xlu0 %v2237
    %2240 = vperm.xlu0 %2239, %v2235
    %v2241 = vpop.permute.xlu0 %2240
    %v2242 = vperm.slane %v1735, 5
    %v2243 = vlaneseq
    %v2244 = vshrl.u32 %v2243, 7
    %2246 = vset.pattern.permute.xlu0 %v2244
    %2247 = vperm.xlu0 %2246, %v2242
    %v2248 = vpop.permute.xlu0 %2247
    %v2249 = vperm.slane %v1735, 6
    %v2250 = vlaneseq
    %v2251 = vshrl.u32 %v2250, 7
    %2253 = vset.pattern.permute.xlu0 %v2251
    %2254 = vperm.xlu0 %2253, %v2249
    %v2255 = vpop.permute.xlu0 %2254
    %v2256 = vperm.slane %v1735, 7
    %v2257 = vlaneseq
    %v2258 = vshrl.u32 %v2257, 7
    %2260 = vset.pattern.permute.xlu0 %v2258
    %2261 = vperm.xlu0 %2260, %v2256
    %v2262 = vpop.permute.xlu0 %2261
    %v2263 = vperm.slane %v1736, 0
    %v2264 = vlaneseq
    %v2265 = vshrl.u32 %v2264, 7
    %2267 = vset.pattern.permute.xlu0 %v2265
    %2268 = vperm.xlu0 %2267, %v2263
    %v2269 = vpop.permute.xlu0 %2268
    %v2270 = vperm.slane %v1736, 1
    %v2271 = vlaneseq
    %v2272 = vshrl.u32 %v2271, 7
    %2274 = vset.pattern.permute.xlu0 %v2272
    %2275 = vperm.xlu0 %2274, %v2270
    %v2276 = vpop.permute.xlu0 %2275
    %v2277 = vperm.slane %v1736, 2
    %v2278 = vlaneseq
    %v2279 = vshrl.u32 %v2278, 7
    %2281 = vset.pattern.permute.xlu0 %v2279
    %2282 = vperm.xlu0 %2281, %v2277
    %v2283 = vpop.permute.xlu0 %2282
    %v2284 = vperm.slane %v1736, 3
    %v2285 = vlaneseq
    %v2286 = vshrl.u32 %v2285, 7
    %2288 = vset.pattern.permute.xlu0 %v2286
    %2289 = vperm.xlu0 %2288, %v2284
    %v2290 = vpop.permute.xlu0 %2289
    %v2291 = vperm.slane %v1736, 4
    %v2292 = vlaneseq
    %v2293 = vshrl.u32 %v2292, 7
    %2295 = vset.pattern.permute.xlu0 %v2293
    %2296 = vperm.xlu0 %2295, %v2291
    %v2297 = vpop.permute.xlu0 %2296
    %v2298 = vperm.slane %v1736, 5
    %v2299 = vlaneseq
    %v2300 = vshrl.u32 %v2299, 7
    %2302 = vset.pattern.permute.xlu0 %v2300
    %2303 = vperm.xlu0 %2302, %v2298
    %v2304 = vpop.permute.xlu0 %2303
    %v2305 = vperm.slane %v1736, 6
    %v2306 = vlaneseq
    %v2307 = vshrl.u32 %v2306, 7
    %2309 = vset.pattern.permute.xlu0 %v2307
    %2310 = vperm.xlu0 %2309, %v2305
    %v2311 = vpop.permute.xlu0 %2310
    %v2312 = vperm.slane %v1736, 7
    %v2313 = vlaneseq
    %v2314 = vshrl.u32 %v2313, 7
    %2316 = vset.pattern.permute.xlu0 %v2314
    %2317 = vperm.xlu0 %2316, %v2312
    %v2318 = vpop.permute.xlu0 %2317
    %v2319 = vperm.slane %v1737, 0
    %v2320 = vlaneseq
    %v2321 = vshrl.u32 %v2320, 7
    %2323 = vset.pattern.permute.xlu0 %v2321
    %2324 = vperm.xlu0 %2323, %v2319
    %v2325 = vpop.permute.xlu0 %2324
    %v2326 = vperm.slane %v1737, 1
    %v2327 = vlaneseq
    %v2328 = vshrl.u32 %v2327, 7
    %2330 = vset.pattern.permute.xlu0 %v2328
    %2331 = vperm.xlu0 %2330, %v2326
    %v2332 = vpop.permute.xlu0 %2331
    %v2333 = vperm.slane %v1737, 2
    %v2334 = vlaneseq
    %v2335 = vshrl.u32 %v2334, 7
    %2337 = vset.pattern.permute.xlu0 %v2335
    %2338 = vperm.xlu0 %2337, %v2333
    %v2339 = vpop.permute.xlu0 %2338
    %v2340 = vperm.slane %v1737, 3
    %v2341 = vlaneseq
    %v2342 = vshrl.u32 %v2341, 7
    %2344 = vset.pattern.permute.xlu0 %v2342
    %2345 = vperm.xlu0 %2344, %v2340
    %v2346 = vpop.permute.xlu0 %2345
    %v2347 = vperm.slane %v1737, 4
    %v2348 = vlaneseq
    %v2349 = vshrl.u32 %v2348, 7
    %2351 = vset.pattern.permute.xlu0 %v2349
    %2352 = vperm.xlu0 %2351, %v2347
    %v2353 = vpop.permute.xlu0 %2352
    %v2354 = vperm.slane %v1737, 5
    %v2355 = vlaneseq
    %v2356 = vshrl.u32 %v2355, 7
    %2358 = vset.pattern.permute.xlu0 %v2356
    %2359 = vperm.xlu0 %2358, %v2354
    %v2360 = vpop.permute.xlu0 %2359
    %v2361 = vperm.slane %v1737, 6
    %v2362 = vlaneseq
    %v2363 = vshrl.u32 %v2362, 7
    %2365 = vset.pattern.permute.xlu0 %v2363
    %2366 = vperm.xlu0 %2365, %v2361
    %v2367 = vpop.permute.xlu0 %2366
    %v2368 = vperm.slane %v1737, 7
    %v2369 = vlaneseq
    %v2370 = vshrl.u32 %v2369, 7
    %2372 = vset.pattern.permute.xlu0 %v2370
    %2373 = vperm.xlu0 %2372, %v2368
    %v2374 = vpop.permute.xlu0 %2373
    %v2375 = vperm.slane %v1738, 0
    %v2376 = vlaneseq
    %v2377 = vshrl.u32 %v2376, 7
    %2379 = vset.pattern.permute.xlu0 %v2377
    %2380 = vperm.xlu0 %2379, %v2375
    %v2381 = vpop.permute.xlu0 %2380
    %v2382 = vperm.slane %v1738, 1
    %v2383 = vlaneseq
    %v2384 = vshrl.u32 %v2383, 7
    %2386 = vset.pattern.permute.xlu0 %v2384
    %2387 = vperm.xlu0 %2386, %v2382
    %v2388 = vpop.permute.xlu0 %2387
    %v2389 = vperm.slane %v1738, 2
    %v2390 = vlaneseq
    %v2391 = vshrl.u32 %v2390, 7
    %2393 = vset.pattern.permute.xlu0 %v2391
    %2394 = vperm.xlu0 %2393, %v2389
    %v2395 = vpop.permute.xlu0 %2394
    %v2396 = vperm.slane %v1738, 3
    %v2397 = vlaneseq
    %v2398 = vshrl.u32 %v2397, 7
    %2400 = vset.pattern.permute.xlu0 %v2398
    %2401 = vperm.xlu0 %2400, %v2396
    %v2402 = vpop.permute.xlu0 %2401
    %v2403 = vperm.slane %v1738, 4
    %v2404 = vlaneseq
    %v2405 = vshrl.u32 %v2404, 7
    %2407 = vset.pattern.permute.xlu0 %v2405
    %2408 = vperm.xlu0 %2407, %v2403
    %v2409 = vpop.permute.xlu0 %2408
    %v2410 = vperm.slane %v1738, 5
    %v2411 = vlaneseq
    %v2412 = vshrl.u32 %v2411, 7
    %2414 = vset.pattern.permute.xlu0 %v2412
    %2415 = vperm.xlu0 %2414, %v2410
    %v2416 = vpop.permute.xlu0 %2415
    %v2417 = vperm.slane %v1738, 6
    %v2418 = vlaneseq
    %v2419 = vshrl.u32 %v2418, 7
    %2421 = vset.pattern.permute.xlu0 %v2419
    %2422 = vperm.xlu0 %2421, %v2417
    %v2423 = vpop.permute.xlu0 %2422
    %v2424 = vperm.slane %v1738, 7
    %v2425 = vlaneseq
    %v2426 = vshrl.u32 %v2425, 7
    %2428 = vset.pattern.permute.xlu0 %v2426
    %2429 = vperm.xlu0 %2428, %v2424
    %v2430 = vpop.permute.xlu0 %2429
    %v2431 = vperm.slane %v1739, 0
    %v2432 = vlaneseq
    %v2433 = vshrl.u32 %v2432, 7
    %2435 = vset.pattern.permute.xlu0 %v2433
    %2436 = vperm.xlu0 %2435, %v2431
    %v2437 = vpop.permute.xlu0 %2436
    %v2438 = vperm.slane %v1739, 1
    %v2439 = vlaneseq
    %v2440 = vshrl.u32 %v2439, 7
    %2442 = vset.pattern.permute.xlu0 %v2440
    %2443 = vperm.xlu0 %2442, %v2438
    %v2444 = vpop.permute.xlu0 %2443
    %v2445 = vperm.slane %v1739, 2
    %v2446 = vlaneseq
    %v2447 = vshrl.u32 %v2446, 7
    %2449 = vset.pattern.permute.xlu0 %v2447
    %2450 = vperm.xlu0 %2449, %v2445
    %v2451 = vpop.permute.xlu0 %2450
    %v2452 = vperm.slane %v1739, 3
    %v2453 = vlaneseq
    %v2454 = vshrl.u32 %v2453, 7
    %2456 = vset.pattern.permute.xlu0 %v2454
    %2457 = vperm.xlu0 %2456, %v2452
    %v2458 = vpop.permute.xlu0 %2457
    %v2459 = vperm.slane %v1739, 4
    %v2460 = vlaneseq
    %v2461 = vshrl.u32 %v2460, 7
    %2463 = vset.pattern.permute.xlu0 %v2461
    %2464 = vperm.xlu0 %2463, %v2459
    %v2465 = vpop.permute.xlu0 %2464
    %v2466 = vperm.slane %v1739, 5
    %v2467 = vlaneseq
    %v2468 = vshrl.u32 %v2467, 7
    %2470 = vset.pattern.permute.xlu0 %v2468
    %2471 = vperm.xlu0 %2470, %v2466
    %v2472 = vpop.permute.xlu0 %2471
    %v2473 = vperm.slane %v1739, 6
    %v2474 = vlaneseq
    %v2475 = vshrl.u32 %v2474, 7
    %2477 = vset.pattern.permute.xlu0 %v2475
    %2478 = vperm.xlu0 %2477, %v2473
    %v2479 = vpop.permute.xlu0 %2478
    %v2480 = vperm.slane %v1739, 7
    %v2481 = vlaneseq
    %v2482 = vshrl.u32 %v2481, 7
    %2484 = vset.pattern.permute.xlu0 %v2482
    %2485 = vperm.xlu0 %2484, %v2480
    %v2486 = vpop.permute.xlu0 %2485
    %v2487 = vperm.slane %v1740, 0
    %v2488 = vlaneseq
    %v2489 = vshrl.u32 %v2488, 7
    %2491 = vset.pattern.permute.xlu0 %v2489
    %2492 = vperm.xlu0 %2491, %v2487
    %v2493 = vpop.permute.xlu0 %2492
    %v2494 = vperm.slane %v1740, 1
    %v2495 = vlaneseq
    %v2496 = vshrl.u32 %v2495, 7
    %2498 = vset.pattern.permute.xlu0 %v2496
    %2499 = vperm.xlu0 %2498, %v2494
    %v2500 = vpop.permute.xlu0 %2499
    %v2501 = vperm.slane %v1740, 2
    %v2502 = vlaneseq
    %v2503 = vshrl.u32 %v2502, 7
    %2505 = vset.pattern.permute.xlu0 %v2503
    %2506 = vperm.xlu0 %2505, %v2501
    %v2507 = vpop.permute.xlu0 %2506
    %v2508 = vperm.slane %v1740, 3
    %v2509 = vlaneseq
    %v2510 = vshrl.u32 %v2509, 7
    %2512 = vset.pattern.permute.xlu0 %v2510
    %2513 = vperm.xlu0 %2512, %v2508
    %v2514 = vpop.permute.xlu0 %2513
    %v2515 = vperm.slane %v1740, 4
    %v2516 = vlaneseq
    %v2517 = vshrl.u32 %v2516, 7
    %2519 = vset.pattern.permute.xlu0 %v2517
    %2520 = vperm.xlu0 %2519, %v2515
    %v2521 = vpop.permute.xlu0 %2520
    %v2522 = vperm.slane %v1740, 5
    %v2523 = vlaneseq
    %v2524 = vshrl.u32 %v2523, 7
    %2526 = vset.pattern.permute.xlu0 %v2524
    %2527 = vperm.xlu0 %2526, %v2522
    %v2528 = vpop.permute.xlu0 %2527
    %v2529 = vperm.slane %v1740, 6
    %v2530 = vlaneseq
    %v2531 = vshrl.u32 %v2530, 7
    %2533 = vset.pattern.permute.xlu0 %v2531
    %2534 = vperm.xlu0 %2533, %v2529
    %v2535 = vpop.permute.xlu0 %2534
    %v2536 = vperm.slane %v1740, 7
    %v2537 = vlaneseq
    %v2538 = vshrl.u32 %v2537, 7
    %2540 = vset.pattern.permute.xlu0 %v2538
    %2541 = vperm.xlu0 %2540, %v2536
    %v2542 = vpop.permute.xlu0 %2541
    %v2543 = vperm.slane %v1741, 0
    %v2544 = vlaneseq
    %v2545 = vshrl.u32 %v2544, 7
    %2547 = vset.pattern.permute.xlu0 %v2545
    %2548 = vperm.xlu0 %2547, %v2543
    %v2549 = vpop.permute.xlu0 %2548
    %v2550 = vperm.slane %v1741, 1
    %v2551 = vlaneseq
    %v2552 = vshrl.u32 %v2551, 7
    %2554 = vset.pattern.permute.xlu0 %v2552
    %2555 = vperm.xlu0 %2554, %v2550
    %v2556 = vpop.permute.xlu0 %2555
    %v2557 = vperm.slane %v1741, 2
    %v2558 = vlaneseq
    %v2559 = vshrl.u32 %v2558, 7
    %2561 = vset.pattern.permute.xlu0 %v2559
    %2562 = vperm.xlu0 %2561, %v2557
    %v2563 = vpop.permute.xlu0 %2562
    %v2564 = vperm.slane %v1741, 3
    %v2565 = vlaneseq
    %v2566 = vshrl.u32 %v2565, 7
    %2568 = vset.pattern.permute.xlu0 %v2566
    %2569 = vperm.xlu0 %2568, %v2564
    %v2570 = vpop.permute.xlu0 %2569
    %v2571 = vperm.slane %v1741, 4
    %v2572 = vlaneseq
    %v2573 = vshrl.u32 %v2572, 7
    %2575 = vset.pattern.permute.xlu0 %v2573
    %2576 = vperm.xlu0 %2575, %v2571
    %v2577 = vpop.permute.xlu0 %2576
    %v2578 = vperm.slane %v1741, 5
    %v2579 = vlaneseq
    %v2580 = vshrl.u32 %v2579, 7
    %2582 = vset.pattern.permute.xlu0 %v2580
    %2583 = vperm.xlu0 %2582, %v2578
    %v2584 = vpop.permute.xlu0 %2583
    %v2585 = vperm.slane %v1741, 6
    %v2586 = vlaneseq
    %v2587 = vshrl.u32 %v2586, 7
    %2589 = vset.pattern.permute.xlu0 %v2587
    %2590 = vperm.xlu0 %2589, %v2585
    %v2591 = vpop.permute.xlu0 %2590
    %v2592 = vperm.slane %v1741, 7
    %v2593 = vlaneseq
    %v2594 = vshrl.u32 %v2593, 7
    %2596 = vset.pattern.permute.xlu0 %v2594
    %2597 = vperm.xlu0 %2596, %v2592
    %v2598 = vpop.permute.xlu0 %2597
    %v2599 = vperm.slane %v1742, 0
    %v2600 = vlaneseq
    %v2601 = vshrl.u32 %v2600, 7
    %2603 = vset.pattern.permute.xlu0 %v2601
    %2604 = vperm.xlu0 %2603, %v2599
    %v2605 = vpop.permute.xlu0 %2604
    %v2606 = vperm.slane %v1742, 1
    %v2607 = vlaneseq
    %v2608 = vshrl.u32 %v2607, 7
    %2610 = vset.pattern.permute.xlu0 %v2608
    %2611 = vperm.xlu0 %2610, %v2606
    %v2612 = vpop.permute.xlu0 %2611
    %v2613 = vperm.slane %v1742, 2
    %v2614 = vlaneseq
    %v2615 = vshrl.u32 %v2614, 7
    %2617 = vset.pattern.permute.xlu0 %v2615
    %2618 = vperm.xlu0 %2617, %v2613
    %v2619 = vpop.permute.xlu0 %2618
    %v2620 = vperm.slane %v1742, 3
    %v2621 = vlaneseq
    %v2622 = vshrl.u32 %v2621, 7
    %2624 = vset.pattern.permute.xlu0 %v2622
    %2625 = vperm.xlu0 %2624, %v2620
    %v2626 = vpop.permute.xlu0 %2625
    %v2627 = vperm.slane %v1742, 4
    %v2628 = vlaneseq
    %v2629 = vshrl.u32 %v2628, 7
    %2631 = vset.pattern.permute.xlu0 %v2629
    %2632 = vperm.xlu0 %2631, %v2627
    %v2633 = vpop.permute.xlu0 %2632
    %v2634 = vperm.slane %v1742, 5
    %v2635 = vlaneseq
    %v2636 = vshrl.u32 %v2635, 7
    %2638 = vset.pattern.permute.xlu0 %v2636
    %2639 = vperm.xlu0 %2638, %v2634
    %v2640 = vpop.permute.xlu0 %2639
    %v2641 = vperm.slane %v1742, 6
    %v2642 = vlaneseq
    %v2643 = vshrl.u32 %v2642, 7
    %2645 = vset.pattern.permute.xlu0 %v2643
    %2646 = vperm.xlu0 %2645, %v2641
    %v2647 = vpop.permute.xlu0 %2646
    %v2648 = vperm.slane %v1742, 7
    %v2649 = vlaneseq
    %v2650 = vshrl.u32 %v2649, 7
    %2652 = vset.pattern.permute.xlu0 %v2650
    %2653 = vperm.xlu0 %2652, %v2648
    %v2654 = vpop.permute.xlu0 %2653
    %v2783 = vmul.f32 %v1599, %v1765
    %v2784 = vmul.f32 %v1600, %v1772
    %v2785 = vmul.f32 %v1601, %v1779
    %v2786 = vmul.f32 %v1602, %v1786
    %v2787 = vmul.f32 %v1603, %v1793
    %v2788 = vmul.f32 %v1604, %v1800
    %v2789 = vmul.f32 %v1605, %v1807
    %v2790 = vmul.f32 %v1606, %v1814
    %v2791 = vmul.f32 %v1607, %v1821
    %v2792 = vmul.f32 %v1608, %v1828
    %v2793 = vmul.f32 %v1609, %v1835
    %v2794 = vmul.f32 %v1610, %v1842
    %v2795 = vmul.f32 %v1611, %v1849
    %v2796 = vmul.f32 %v1612, %v1856
    %v2797 = vmul.f32 %v1613, %v1863
    %v2798 = vmul.f32 %v1614, %v1870
    %v2799 = vmul.f32 %v1615, %v1877
    %v2800 = vmul.f32 %v1616, %v1884
    %v2801 = vmul.f32 %v1617, %v1891
    %v2802 = vmul.f32 %v1618, %v1898
    %v2803 = vmul.f32 %v1619, %v1905
    %v2804 = vmul.f32 %v1620, %v1912
    %v2805 = vmul.f32 %v1621, %v1919
    %v2806 = vmul.f32 %v1622, %v1926
    %v2807 = vmul.f32 %v1623, %v1933
    %v2808 = vmul.f32 %v1624, %v1940
    %v2809 = vmul.f32 %v1625, %v1947
    %v2810 = vmul.f32 %v1626, %v1954
    %v2811 = vmul.f32 %v1627, %v1961
    %v2812 = vmul.f32 %v1628, %v1968
    %v2813 = vmul.f32 %v1629, %v1975
    %v2814 = vmul.f32 %v1630, %v1982
    %v2815 = vmul.f32 %v1631, %v1989
    %v2816 = vmul.f32 %v1632, %v1996
    %v2817 = vmul.f32 %v1633, %v2003
    %v2818 = vmul.f32 %v1634, %v2010
    %v2819 = vmul.f32 %v1635, %v2017
    %v2820 = vmul.f32 %v1636, %v2024
    %v2821 = vmul.f32 %v1637, %v2031
    %v2822 = vmul.f32 %v1638, %v2038
    %v2823 = vmul.f32 %v1639, %v2045
    %v2824 = vmul.f32 %v1640, %v2052
    %v2825 = vmul.f32 %v1641, %v2059
    %v2826 = vmul.f32 %v1642, %v2066
    %v2827 = vmul.f32 %v1643, %v2073
    %v2828 = vmul.f32 %v1644, %v2080
    %v2829 = vmul.f32 %v1645, %v2087
    %v2830 = vmul.f32 %v1646, %v2094
    %v2831 = vmul.f32 %v1647, %v2101
    %v2832 = vmul.f32 %v1648, %v2108
    %v2833 = vmul.f32 %v1649, %v2115
    %v2834 = vmul.f32 %v1650, %v2122
    %v2835 = vmul.f32 %v1651, %v2129
    %v2836 = vmul.f32 %v1652, %v2136
    %v2837 = vmul.f32 %v1653, %v2143
    %v2838 = vmul.f32 %v1654, %v2150
    %v2839 = vmul.f32 %v1655, %v2157
    %v2840 = vmul.f32 %v1656, %v2164
    %v2841 = vmul.f32 %v1657, %v2171
    %v2842 = vmul.f32 %v1658, %v2178
    %v2843 = vmul.f32 %v1659, %v2185
    %v2844 = vmul.f32 %v1660, %v2192
    %v2845 = vmul.f32 %v1661, %v2199
    %v2846 = vmul.f32 %v1662, %v2206
    %v2847 = vmul.f32 %v1663, %v2213
    %v2848 = vmul.f32 %v1664, %v2220
    %v2849 = vmul.f32 %v1665, %v2227
    %v2850 = vmul.f32 %v1666, %v2234
    %v2851 = vmul.f32 %v1667, %v2241
    %v2852 = vmul.f32 %v1668, %v2248
    %v2853 = vmul.f32 %v1669, %v2255
    %v2854 = vmul.f32 %v1670, %v2262
    %v2855 = vmul.f32 %v1671, %v2269
    %v2856 = vmul.f32 %v1672, %v2276
    %v2857 = vmul.f32 %v1673, %v2283
    %v2858 = vmul.f32 %v1674, %v2290
    %v2859 = vmul.f32 %v1675, %v2297
    %v2860 = vmul.f32 %v1676, %v2304
    %v2861 = vmul.f32 %v1677, %v2311
    %v2862 = vmul.f32 %v1678, %v2318
    %v2863 = vmul.f32 %v1679, %v2325
    %v2864 = vmul.f32 %v1680, %v2332
    %v2865 = vmul.f32 %v1681, %v2339
    %v2866 = vmul.f32 %v1682, %v2346
    %v2867 = vmul.f32 %v1683, %v2353
    %v2868 = vmul.f32 %v1684, %v2360
    %v2869 = vmul.f32 %v1685, %v2367
    %v2870 = vmul.f32 %v1686, %v2374
    %v2871 = vmul.f32 %v1687, %v2381
    %v2872 = vmul.f32 %v1688, %v2388
    %v2873 = vmul.f32 %v1689, %v2395
    %v2874 = vmul.f32 %v1690, %v2402
    %v2875 = vmul.f32 %v1691, %v2409
    %v2876 = vmul.f32 %v1692, %v2416
    %v2877 = vmul.f32 %v1693, %v2423
    %v2878 = vmul.f32 %v1694, %v2430
    %v2879 = vmul.f32 %v1695, %v2437
    %v2880 = vmul.f32 %v1696, %v2444
    %v2881 = vmul.f32 %v1697, %v2451
    %v2882 = vmul.f32 %v1698, %v2458
    %v2883 = vmul.f32 %v1699, %v2465
    %v2884 = vmul.f32 %v1700, %v2472
    %v2885 = vmul.f32 %v1701, %v2479
    %v2886 = vmul.f32 %v1702, %v2486
    %v2887 = vmul.f32 %v1703, %v2493
    %v2888 = vmul.f32 %v1704, %v2500
    %v2889 = vmul.f32 %v1705, %v2507
    %v2890 = vmul.f32 %v1706, %v2514
    %v2891 = vmul.f32 %v1707, %v2521
    %v2892 = vmul.f32 %v1708, %v2528
    %v2893 = vmul.f32 %v1709, %v2535
    %v2894 = vmul.f32 %v1710, %v2542
    %v2895 = vmul.f32 %v1711, %v2549
    %v2896 = vmul.f32 %v1712, %v2556
    %v2897 = vmul.f32 %v1713, %v2563
    %v2898 = vmul.f32 %v1714, %v2570
    %v2899 = vmul.f32 %v1715, %v2577
    %v2900 = vmul.f32 %v1716, %v2584
    %v2901 = vmul.f32 %v1717, %v2591
    %v2902 = vmul.f32 %v1718, %v2598
    %v2903 = vmul.f32 %v1719, %v2605
    %v2904 = vmul.f32 %v1720, %v2612
    %v2905 = vmul.f32 %v1721, %v2619
    %v2906 = vmul.f32 %v1722, %v2626
    %v2907 = vmul.f32 %v1723, %v2633
    %v2908 = vmul.f32 %v1724, %v2640
    %v2909 = vmul.f32 %v1725, %v2647
    %v2910 = vmul.f32 %v1726, %v2654
    %3039 = vset.pattern.permute.xlu0 0
    %3040 = vperm.xlu0 %3039, %v2783
    %v3041 = vpop.permute.xlu0 %3040
    %3042 = vset.pattern.permute.xlu0 0
    %3043 = vperm.xlu0 %3042, %v2784
    %v3044 = vpop.permute.xlu0 %3043
    %3045 = vset.pattern.permute.xlu0 0
    %3046 = vperm.xlu0 %3045, %v2785
    %v3047 = vpop.permute.xlu0 %3046
    %3048 = vset.pattern.permute.xlu0 0
    %3049 = vperm.xlu0 %3048, %v2786
    %v3050 = vpop.permute.xlu0 %3049
    %3051 = vset.pattern.permute.xlu0 0
    %3052 = vperm.xlu0 %3051, %v2787
    %v3053 = vpop.permute.xlu0 %3052
    %3054 = vset.pattern.permute.xlu0 0
    %3055 = vperm.xlu0 %3054, %v2788
    %v3056 = vpop.permute.xlu0 %3055
    %3057 = vset.pattern.permute.xlu0 0
    %3058 = vperm.xlu0 %3057, %v2789
    %v3059 = vpop.permute.xlu0 %3058
    %3060 = vset.pattern.permute.xlu0 0
    %3061 = vperm.xlu0 %3060, %v2790
    %v3062 = vpop.permute.xlu0 %3061
    %3063 = vset.pattern.permute.xlu0 0
    %3064 = vperm.xlu0 %3063, %v2791
    %v3065 = vpop.permute.xlu0 %3064
    %3066 = vset.pattern.permute.xlu0 0
    %3067 = vperm.xlu0 %3066, %v2792
    %v3068 = vpop.permute.xlu0 %3067
    %3069 = vset.pattern.permute.xlu0 0
    %3070 = vperm.xlu0 %3069, %v2793
    %v3071 = vpop.permute.xlu0 %3070
    %3072 = vset.pattern.permute.xlu0 0
    %3073 = vperm.xlu0 %3072, %v2794
    %v3074 = vpop.permute.xlu0 %3073
    %3075 = vset.pattern.permute.xlu0 0
    %3076 = vperm.xlu0 %3075, %v2795
    %v3077 = vpop.permute.xlu0 %3076
    %3078 = vset.pattern.permute.xlu0 0
    %3079 = vperm.xlu0 %3078, %v2796
    %v3080 = vpop.permute.xlu0 %3079
    %3081 = vset.pattern.permute.xlu0 0
    %3082 = vperm.xlu0 %3081, %v2797
    %v3083 = vpop.permute.xlu0 %3082
    %3084 = vset.pattern.permute.xlu0 0
    %3085 = vperm.xlu0 %3084, %v2798
    %v3086 = vpop.permute.xlu0 %3085
    %3087 = vset.pattern.permute.xlu0 0
    %3088 = vperm.xlu0 %3087, %v2799
    %v3089 = vpop.permute.xlu0 %3088
    %3090 = vset.pattern.permute.xlu0 0
    %3091 = vperm.xlu0 %3090, %v2800
    %v3092 = vpop.permute.xlu0 %3091
    %3093 = vset.pattern.permute.xlu0 0
    %3094 = vperm.xlu0 %3093, %v2801
    %v3095 = vpop.permute.xlu0 %3094
    %3096 = vset.pattern.permute.xlu0 0
    %3097 = vperm.xlu0 %3096, %v2802
    %v3098 = vpop.permute.xlu0 %3097
    %3099 = vset.pattern.permute.xlu0 0
    %3100 = vperm.xlu0 %3099, %v2803
    %v3101 = vpop.permute.xlu0 %3100
    %3102 = vset.pattern.permute.xlu0 0
    %3103 = vperm.xlu0 %3102, %v2804
    %v3104 = vpop.permute.xlu0 %3103
    %3105 = vset.pattern.permute.xlu0 0
    %3106 = vperm.xlu0 %3105, %v2805
    %v3107 = vpop.permute.xlu0 %3106
    %3108 = vset.pattern.permute.xlu0 0
    %3109 = vperm.xlu0 %3108, %v2806
    %v3110 = vpop.permute.xlu0 %3109
    %3111 = vset.pattern.permute.xlu0 0
    %3112 = vperm.xlu0 %3111, %v2807
    %v3113 = vpop.permute.xlu0 %3112
    %3114 = vset.pattern.permute.xlu0 0
    %3115 = vperm.xlu0 %3114, %v2808
    %v3116 = vpop.permute.xlu0 %3115
    %3117 = vset.pattern.permute.xlu0 0
    %3118 = vperm.xlu0 %3117, %v2809
    %v3119 = vpop.permute.xlu0 %3118
    %3120 = vset.pattern.permute.xlu0 0
    %3121 = vperm.xlu0 %3120, %v2810
    %v3122 = vpop.permute.xlu0 %3121
    %3123 = vset.pattern.permute.xlu0 0
    %3124 = vperm.xlu0 %3123, %v2811
    %v3125 = vpop.permute.xlu0 %3124
    %3126 = vset.pattern.permute.xlu0 0
    %3127 = vperm.xlu0 %3126, %v2812
    %v3128 = vpop.permute.xlu0 %3127
    %3129 = vset.pattern.permute.xlu0 0
    %3130 = vperm.xlu0 %3129, %v2813
    %v3131 = vpop.permute.xlu0 %3130
    %3132 = vset.pattern.permute.xlu0 0
    %3133 = vperm.xlu0 %3132, %v2814
    %v3134 = vpop.permute.xlu0 %3133
    %3135 = vset.pattern.permute.xlu0 0
    %3136 = vperm.xlu0 %3135, %v2815
    %v3137 = vpop.permute.xlu0 %3136
    %3138 = vset.pattern.permute.xlu0 0
    %3139 = vperm.xlu0 %3138, %v2816
    %v3140 = vpop.permute.xlu0 %3139
    %3141 = vset.pattern.permute.xlu0 0
    %3142 = vperm.xlu0 %3141, %v2817
    %v3143 = vpop.permute.xlu0 %3142
    %3144 = vset.pattern.permute.xlu0 0
    %3145 = vperm.xlu0 %3144, %v2818
    %v3146 = vpop.permute.xlu0 %3145
    %3147 = vset.pattern.permute.xlu0 0
    %3148 = vperm.xlu0 %3147, %v2819
    %v3149 = vpop.permute.xlu0 %3148
    %3150 = vset.pattern.permute.xlu0 0
    %3151 = vperm.xlu0 %3150, %v2820
    %v3152 = vpop.permute.xlu0 %3151
    %3153 = vset.pattern.permute.xlu0 0
    %3154 = vperm.xlu0 %3153, %v2821
    %v3155 = vpop.permute.xlu0 %3154
    %3156 = vset.pattern.permute.xlu0 0
    %3157 = vperm.xlu0 %3156, %v2822
    %v3158 = vpop.permute.xlu0 %3157
    %3159 = vset.pattern.permute.xlu0 0
    %3160 = vperm.xlu0 %3159, %v2823
    %v3161 = vpop.permute.xlu0 %3160
    %3162 = vset.pattern.permute.xlu0 0
    %3163 = vperm.xlu0 %3162, %v2824
    %v3164 = vpop.permute.xlu0 %3163
    %3165 = vset.pattern.permute.xlu0 0
    %3166 = vperm.xlu0 %3165, %v2825
    %v3167 = vpop.permute.xlu0 %3166
    %3168 = vset.pattern.permute.xlu0 0
    %3169 = vperm.xlu0 %3168, %v2826
    %v3170 = vpop.permute.xlu0 %3169
    %3171 = vset.pattern.permute.xlu0 0
    %3172 = vperm.xlu0 %3171, %v2827
    %v3173 = vpop.permute.xlu0 %3172
    %3174 = vset.pattern.permute.xlu0 0
    %3175 = vperm.xlu0 %3174, %v2828
    %v3176 = vpop.permute.xlu0 %3175
    %3177 = vset.pattern.permute.xlu0 0
    %3178 = vperm.xlu0 %3177, %v2829
    %v3179 = vpop.permute.xlu0 %3178
    %3180 = vset.pattern.permute.xlu0 0
    %3181 = vperm.xlu0 %3180, %v2830
    %v3182 = vpop.permute.xlu0 %3181
    %3183 = vset.pattern.permute.xlu0 0
    %3184 = vperm.xlu0 %3183, %v2831
    %v3185 = vpop.permute.xlu0 %3184
    %3186 = vset.pattern.permute.xlu0 0
    %3187 = vperm.xlu0 %3186, %v2832
    %v3188 = vpop.permute.xlu0 %3187
    %3189 = vset.pattern.permute.xlu0 0
    %3190 = vperm.xlu0 %3189, %v2833
    %v3191 = vpop.permute.xlu0 %3190
    %3192 = vset.pattern.permute.xlu0 0
    %3193 = vperm.xlu0 %3192, %v2834
    %v3194 = vpop.permute.xlu0 %3193
    %3195 = vset.pattern.permute.xlu0 0
    %3196 = vperm.xlu0 %3195, %v2835
    %v3197 = vpop.permute.xlu0 %3196
    %3198 = vset.pattern.permute.xlu0 0
    %3199 = vperm.xlu0 %3198, %v2836
    %v3200 = vpop.permute.xlu0 %3199
    %3201 = vset.pattern.permute.xlu0 0
    %3202 = vperm.xlu0 %3201, %v2837
    %v3203 = vpop.permute.xlu0 %3202
    %3204 = vset.pattern.permute.xlu0 0
    %3205 = vperm.xlu0 %3204, %v2838
    %v3206 = vpop.permute.xlu0 %3205
    %3207 = vset.pattern.permute.xlu0 0
    %3208 = vperm.xlu0 %3207, %v2839
    %v3209 = vpop.permute.xlu0 %3208
    %3210 = vset.pattern.permute.xlu0 0
    %3211 = vperm.xlu0 %3210, %v2840
    %v3212 = vpop.permute.xlu0 %3211
    %3213 = vset.pattern.permute.xlu0 0
    %3214 = vperm.xlu0 %3213, %v2841
    %v3215 = vpop.permute.xlu0 %3214
    %3216 = vset.pattern.permute.xlu0 0
    %3217 = vperm.xlu0 %3216, %v2842
    %v3218 = vpop.permute.xlu0 %3217
    %3219 = vset.pattern.permute.xlu0 0
    %3220 = vperm.xlu0 %3219, %v2843
    %v3221 = vpop.permute.xlu0 %3220
    %3222 = vset.pattern.permute.xlu0 0
    %3223 = vperm.xlu0 %3222, %v2844
    %v3224 = vpop.permute.xlu0 %3223
    %3225 = vset.pattern.permute.xlu0 0
    %3226 = vperm.xlu0 %3225, %v2845
    %v3227 = vpop.permute.xlu0 %3226
    %3228 = vset.pattern.permute.xlu0 0
    %3229 = vperm.xlu0 %3228, %v2846
    %v3230 = vpop.permute.xlu0 %3229
    %3231 = vset.pattern.permute.xlu0 0
    %3232 = vperm.xlu0 %3231, %v2847
    %v3233 = vpop.permute.xlu0 %3232
    %3234 = vset.pattern.permute.xlu0 0
    %3235 = vperm.xlu0 %3234, %v2848
    %v3236 = vpop.permute.xlu0 %3235
    %3237 = vset.pattern.permute.xlu0 0
    %3238 = vperm.xlu0 %3237, %v2849
    %v3239 = vpop.permute.xlu0 %3238
    %3240 = vset.pattern.permute.xlu0 0
    %3241 = vperm.xlu0 %3240, %v2850
    %v3242 = vpop.permute.xlu0 %3241
    %3243 = vset.pattern.permute.xlu0 0
    %3244 = vperm.xlu0 %3243, %v2851
    %v3245 = vpop.permute.xlu0 %3244
    %3246 = vset.pattern.permute.xlu0 0
    %3247 = vperm.xlu0 %3246, %v2852
    %v3248 = vpop.permute.xlu0 %3247
    %3249 = vset.pattern.permute.xlu0 0
    %3250 = vperm.xlu0 %3249, %v2853
    %v3251 = vpop.permute.xlu0 %3250
    %3252 = vset.pattern.permute.xlu0 0
    %3253 = vperm.xlu0 %3252, %v2854
    %v3254 = vpop.permute.xlu0 %3253
    %3255 = vset.pattern.permute.xlu0 0
    %3256 = vperm.xlu0 %3255, %v2855
    %v3257 = vpop.permute.xlu0 %3256
    %3258 = vset.pattern.permute.xlu0 0
    %3259 = vperm.xlu0 %3258, %v2856
    %v3260 = vpop.permute.xlu0 %3259
    %3261 = vset.pattern.permute.xlu0 0
    %3262 = vperm.xlu0 %3261, %v2857
    %v3263 = vpop.permute.xlu0 %3262
    %3264 = vset.pattern.permute.xlu0 0
    %3265 = vperm.xlu0 %3264, %v2858
    %v3266 = vpop.permute.xlu0 %3265
    %3267 = vset.pattern.permute.xlu0 0
    %3268 = vperm.xlu0 %3267, %v2859
    %v3269 = vpop.permute.xlu0 %3268
    %3270 = vset.pattern.permute.xlu0 0
    %3271 = vperm.xlu0 %3270, %v2860
    %v3272 = vpop.permute.xlu0 %3271
    %3273 = vset.pattern.permute.xlu0 0
    %3274 = vperm.xlu0 %3273, %v2861
    %v3275 = vpop.permute.xlu0 %3274
    %3276 = vset.pattern.permute.xlu0 0
    %3277 = vperm.xlu0 %3276, %v2862
    %v3278 = vpop.permute.xlu0 %3277
    %3279 = vset.pattern.permute.xlu0 0
    %3280 = vperm.xlu0 %3279, %v2863
    %v3281 = vpop.permute.xlu0 %3280
    %3282 = vset.pattern.permute.xlu0 0
    %3283 = vperm.xlu0 %3282, %v2864
    %v3284 = vpop.permute.xlu0 %3283
    %3285 = vset.pattern.permute.xlu0 0
    %3286 = vperm.xlu0 %3285, %v2865
    %v3287 = vpop.permute.xlu0 %3286
    %3288 = vset.pattern.permute.xlu0 0
    %3289 = vperm.xlu0 %3288, %v2866
    %v3290 = vpop.permute.xlu0 %3289
    %3291 = vset.pattern.permute.xlu0 0
    %3292 = vperm.xlu0 %3291, %v2867
    %v3293 = vpop.permute.xlu0 %3292
    %3294 = vset.pattern.permute.xlu0 0
    %3295 = vperm.xlu0 %3294, %v2868
    %v3296 = vpop.permute.xlu0 %3295
    %3297 = vset.pattern.permute.xlu0 0
    %3298 = vperm.xlu0 %3297, %v2869
    %v3299 = vpop.permute.xlu0 %3298
    %3300 = vset.pattern.permute.xlu0 0
    %3301 = vperm.xlu0 %3300, %v2870
    %v3302 = vpop.permute.xlu0 %3301
    %3303 = vset.pattern.permute.xlu0 0
    %3304 = vperm.xlu0 %3303, %v2871
    %v3305 = vpop.permute.xlu0 %3304
    %3306 = vset.pattern.permute.xlu0 0
    %3307 = vperm.xlu0 %3306, %v2872
    %v3308 = vpop.permute.xlu0 %3307
    %3309 = vset.pattern.permute.xlu0 0
    %3310 = vperm.xlu0 %3309, %v2873
    %v3311 = vpop.permute.xlu0 %3310
    %3312 = vset.pattern.permute.xlu0 0
    %3313 = vperm.xlu0 %3312, %v2874
    %v3314 = vpop.permute.xlu0 %3313
    %3315 = vset.pattern.permute.xlu0 0
    %3316 = vperm.xlu0 %3315, %v2875
    %v3317 = vpop.permute.xlu0 %3316
    %3318 = vset.pattern.permute.xlu0 0
    %3319 = vperm.xlu0 %3318, %v2876
    %v3320 = vpop.permute.xlu0 %3319
    %3321 = vset.pattern.permute.xlu0 0
    %3322 = vperm.xlu0 %3321, %v2877
    %v3323 = vpop.permute.xlu0 %3322
    %3324 = vset.pattern.permute.xlu0 0
    %3325 = vperm.xlu0 %3324, %v2878
    %v3326 = vpop.permute.xlu0 %3325
    %3327 = vset.pattern.permute.xlu0 0
    %3328 = vperm.xlu0 %3327, %v2879
    %v3329 = vpop.permute.xlu0 %3328
    %3330 = vset.pattern.permute.xlu0 0
    %3331 = vperm.xlu0 %3330, %v2880
    %v3332 = vpop.permute.xlu0 %3331
    %3333 = vset.pattern.permute.xlu0 0
    %3334 = vperm.xlu0 %3333, %v2881
    %v3335 = vpop.permute.xlu0 %3334
    %3336 = vset.pattern.permute.xlu0 0
    %3337 = vperm.xlu0 %3336, %v2882
    %v3338 = vpop.permute.xlu0 %3337
    %3339 = vset.pattern.permute.xlu0 0
    %3340 = vperm.xlu0 %3339, %v2883
    %v3341 = vpop.permute.xlu0 %3340
    %3342 = vset.pattern.permute.xlu0 0
    %3343 = vperm.xlu0 %3342, %v2884
    %v3344 = vpop.permute.xlu0 %3343
    %3345 = vset.pattern.permute.xlu0 0
    %3346 = vperm.xlu0 %3345, %v2885
    %v3347 = vpop.permute.xlu0 %3346
    %3348 = vset.pattern.permute.xlu0 0
    %3349 = vperm.xlu0 %3348, %v2886
    %v3350 = vpop.permute.xlu0 %3349
    %3351 = vset.pattern.permute.xlu0 0
    %3352 = vperm.xlu0 %3351, %v2887
    %v3353 = vpop.permute.xlu0 %3352
    %3354 = vset.pattern.permute.xlu0 0
    %3355 = vperm.xlu0 %3354, %v2888
    %v3356 = vpop.permute.xlu0 %3355
    %3357 = vset.pattern.permute.xlu0 0
    %3358 = vperm.xlu0 %3357, %v2889
    %v3359 = vpop.permute.xlu0 %3358
    %3360 = vset.pattern.permute.xlu0 0
    %3361 = vperm.xlu0 %3360, %v2890
    %v3362 = vpop.permute.xlu0 %3361
    %3363 = vset.pattern.permute.xlu0 0
    %3364 = vperm.xlu0 %3363, %v2891
    %v3365 = vpop.permute.xlu0 %3364
    %3366 = vset.pattern.permute.xlu0 0
    %3367 = vperm.xlu0 %3366, %v2892
    %v3368 = vpop.permute.xlu0 %3367
    %3369 = vset.pattern.permute.xlu0 0
    %3370 = vperm.xlu0 %3369, %v2893
    %v3371 = vpop.permute.xlu0 %3370
    %3372 = vset.pattern.permute.xlu0 0
    %3373 = vperm.xlu0 %3372, %v2894
    %v3374 = vpop.permute.xlu0 %3373
    %3375 = vset.pattern.permute.xlu0 0
    %3376 = vperm.xlu0 %3375, %v2895
    %v3377 = vpop.permute.xlu0 %3376
    %3378 = vset.pattern.permute.xlu0 0
    %3379 = vperm.xlu0 %3378, %v2896
    %v3380 = vpop.permute.xlu0 %3379
    %3381 = vset.pattern.permute.xlu0 0
    %3382 = vperm.xlu0 %3381, %v2897
    %v3383 = vpop.permute.xlu0 %3382
    %3384 = vset.pattern.permute.xlu0 0
    %3385 = vperm.xlu0 %3384, %v2898
    %v3386 = vpop.permute.xlu0 %3385
    %3387 = vset.pattern.permute.xlu0 0
    %3388 = vperm.xlu0 %3387, %v2899
    %v3389 = vpop.permute.xlu0 %3388
    %3390 = vset.pattern.permute.xlu0 0
    %3391 = vperm.xlu0 %3390, %v2900
    %v3392 = vpop.permute.xlu0 %3391
    %3393 = vset.pattern.permute.xlu0 0
    %3394 = vperm.xlu0 %3393, %v2901
    %v3395 = vpop.permute.xlu0 %3394
    %3396 = vset.pattern.permute.xlu0 0
    %3397 = vperm.xlu0 %3396, %v2902
    %v3398 = vpop.permute.xlu0 %3397
    %3399 = vset.pattern.permute.xlu0 0
    %3400 = vperm.xlu0 %3399, %v2903
    %v3401 = vpop.permute.xlu0 %3400
    %3402 = vset.pattern.permute.xlu0 0
    %3403 = vperm.xlu0 %3402, %v2904
    %v3404 = vpop.permute.xlu0 %3403
    %3405 = vset.pattern.permute.xlu0 0
    %3406 = vperm.xlu0 %3405, %v2905
    %v3407 = vpop.permute.xlu0 %3406
    %3408 = vset.pattern.permute.xlu0 0
    %3409 = vperm.xlu0 %3408, %v2906
    %v3410 = vpop.permute.xlu0 %3409
    %3411 = vset.pattern.permute.xlu0 0
    %3412 = vperm.xlu0 %3411, %v2907
    %v3413 = vpop.permute.xlu0 %3412
    %3414 = vset.pattern.permute.xlu0 0
    %3415 = vperm.xlu0 %3414, %v2908
    %v3416 = vpop.permute.xlu0 %3415
    %3417 = vset.pattern.permute.xlu0 0
    %3418 = vperm.xlu0 %3417, %v2909
    %v3419 = vpop.permute.xlu0 %3418
    %3420 = vset.pattern.permute.xlu0 0
    %3421 = vperm.xlu0 %3420, %v2910
    %v3422 = vpop.permute.xlu0 %3421
    %v3423 = vlaneseq
    %v3424 = vand.u32 %v3423, 127
    %v3425 = vperm.slane %v3041, %v3424
    %v3426 = vperm.slane %v3044, %v3424
    %v3427 = vperm.slane %v3047, %v3424
    %v3428 = vperm.slane %v3050, %v3424
    %v3429 = vperm.slane %v3053, %v3424
    %v3430 = vperm.slane %v3056, %v3424
    %v3431 = vperm.slane %v3059, %v3424
    %v3432 = vperm.slane %v3062, %v3424
    %v3433 = vperm.slane %v3065, %v3424
    %v3434 = vperm.slane %v3068, %v3424
    %v3435 = vperm.slane %v3071, %v3424
    %v3436 = vperm.slane %v3074, %v3424
    %v3437 = vperm.slane %v3077, %v3424
    %v3438 = vperm.slane %v3080, %v3424
    %v3439 = vperm.slane %v3083, %v3424
    %v3440 = vperm.slane %v3086, %v3424
    %v3441 = vperm.slane %v3089, %v3424
    %v3442 = vperm.slane %v3092, %v3424
    %v3443 = vperm.slane %v3095, %v3424
    %v3444 = vperm.slane %v3098, %v3424
    %v3445 = vperm.slane %v3101, %v3424
    %v3446 = vperm.slane %v3104, %v3424
    %v3447 = vperm.slane %v3107, %v3424
    %v3448 = vperm.slane %v3110, %v3424
    %v3449 = vperm.slane %v3113, %v3424
    %v3450 = vperm.slane %v3116, %v3424
    %v3451 = vperm.slane %v3119, %v3424
    %v3452 = vperm.slane %v3122, %v3424
    %v3453 = vperm.slane %v3125, %v3424
    %v3454 = vperm.slane %v3128, %v3424
    %v3455 = vperm.slane %v3131, %v3424
    %v3456 = vperm.slane %v3134, %v3424
    %v3457 = vperm.slane %v3137, %v3424
    %v3458 = vperm.slane %v3140, %v3424
    %v3459 = vperm.slane %v3143, %v3424
    %v3460 = vperm.slane %v3146, %v3424
    %v3461 = vperm.slane %v3149, %v3424
    %v3462 = vperm.slane %v3152, %v3424
    %v3463 = vperm.slane %v3155, %v3424
    %v3464 = vperm.slane %v3158, %v3424
    %v3465 = vperm.slane %v3161, %v3424
    %v3466 = vperm.slane %v3164, %v3424
    %v3467 = vperm.slane %v3167, %v3424
    %v3468 = vperm.slane %v3170, %v3424
    %v3469 = vperm.slane %v3173, %v3424
    %v3470 = vperm.slane %v3176, %v3424
    %v3471 = vperm.slane %v3179, %v3424
    %v3472 = vperm.slane %v3182, %v3424
    %v3473 = vperm.slane %v3185, %v3424
    %v3474 = vperm.slane %v3188, %v3424
    %v3475 = vperm.slane %v3191, %v3424
    %v3476 = vperm.slane %v3194, %v3424
    %v3477 = vperm.slane %v3197, %v3424
    %v3478 = vperm.slane %v3200, %v3424
    %v3479 = vperm.slane %v3203, %v3424
    %v3480 = vperm.slane %v3206, %v3424
    %v3481 = vperm.slane %v3209, %v3424
    %v3482 = vperm.slane %v3212, %v3424
    %v3483 = vperm.slane %v3215, %v3424
    %v3484 = vperm.slane %v3218, %v3424
    %v3485 = vperm.slane %v3221, %v3424
    %v3486 = vperm.slane %v3224, %v3424
    %v3487 = vperm.slane %v3227, %v3424
    %v3488 = vperm.slane %v3230, %v3424
    %v3489 = vperm.slane %v3233, %v3424
    %v3490 = vperm.slane %v3236, %v3424
    %v3491 = vperm.slane %v3239, %v3424
    %v3492 = vperm.slane %v3242, %v3424
    %v3493 = vperm.slane %v3245, %v3424
    %v3494 = vperm.slane %v3248, %v3424
    %v3495 = vperm.slane %v3251, %v3424
    %v3496 = vperm.slane %v3254, %v3424
    %v3497 = vperm.slane %v3257, %v3424
    %v3498 = vperm.slane %v3260, %v3424
    %v3499 = vperm.slane %v3263, %v3424
    %v3500 = vperm.slane %v3266, %v3424
    %v3501 = vperm.slane %v3269, %v3424
    %v3502 = vperm.slane %v3272, %v3424
    %v3503 = vperm.slane %v3275, %v3424
    %v3504 = vperm.slane %v3278, %v3424
    %v3505 = vperm.slane %v3281, %v3424
    %v3506 = vperm.slane %v3284, %v3424
    %v3507 = vperm.slane %v3287, %v3424
    %v3508 = vperm.slane %v3290, %v3424
    %v3509 = vperm.slane %v3293, %v3424
    %v3510 = vperm.slane %v3296, %v3424
    %v3511 = vperm.slane %v3299, %v3424
    %v3512 = vperm.slane %v3302, %v3424
    %v3513 = vperm.slane %v3305, %v3424
    %v3514 = vperm.slane %v3308, %v3424
    %v3515 = vperm.slane %v3311, %v3424
    %v3516 = vperm.slane %v3314, %v3424
    %v3517 = vperm.slane %v3317, %v3424
    %v3518 = vperm.slane %v3320, %v3424
    %v3519 = vperm.slane %v3323, %v3424
    %v3520 = vperm.slane %v3326, %v3424
    %v3521 = vperm.slane %v3329, %v3424
    %v3522 = vperm.slane %v3332, %v3424
    %v3523 = vperm.slane %v3335, %v3424
    %v3524 = vperm.slane %v3338, %v3424
    %v3525 = vperm.slane %v3341, %v3424
    %v3526 = vperm.slane %v3344, %v3424
    %v3527 = vperm.slane %v3347, %v3424
    %v3528 = vperm.slane %v3350, %v3424
    %v3529 = vperm.slane %v3353, %v3424
    %v3530 = vperm.slane %v3356, %v3424
    %v3531 = vperm.slane %v3359, %v3424
    %v3532 = vperm.slane %v3362, %v3424
    %v3533 = vperm.slane %v3365, %v3424
    %v3534 = vperm.slane %v3368, %v3424
    %v3535 = vperm.slane %v3371, %v3424
    %v3536 = vperm.slane %v3374, %v3424
    %v3537 = vperm.slane %v3377, %v3424
    %v3538 = vperm.slane %v3380, %v3424
    %v3539 = vperm.slane %v3383, %v3424
    %v3540 = vperm.slane %v3386, %v3424
    %v3541 = vperm.slane %v3389, %v3424
    %v3542 = vperm.slane %v3392, %v3424
    %v3543 = vperm.slane %v3395, %v3424
    %v3544 = vperm.slane %v3398, %v3424
    %v3545 = vperm.slane %v3401, %v3424
    %v3546 = vperm.slane %v3404, %v3424
    %v3547 = vperm.slane %v3407, %v3424
    %v3548 = vperm.slane %v3410, %v3424
    %v3549 = vperm.slane %v3413, %v3424
    %v3550 = vperm.slane %v3416, %v3424
    %v3551 = vperm.slane %v3419, %v3424
    %v3552 = vperm.slane %v3422, %v3424
    %vm3553 = vcmask 1041409
    %v3554 = vsel %vm3553, %v3426, %v3425
    %vm3555 = vcmask 1042434
    %v3556 = vsel %vm3555, %v3427, %v3554
    %vm3557 = vcmask 1043459
    %v3558 = vsel %vm3557, %v3428, %v3556
    %vm3559 = vcmask 1044484
    %v3560 = vsel %vm3559, %v3429, %v3558
    %vm3561 = vcmask 1045509
    %v3562 = vsel %vm3561, %v3430, %v3560
    %vm3563 = vcmask 1046534
    %v3564 = vsel %vm3563, %v3431, %v3562
    %vm3565 = vcmask 1047559
    %v3566 = vsel %vm3565, %v3432, %v3564
    %v3567 = vsel %vm3553, %v3434, %v3433
    %v3568 = vsel %vm3555, %v3435, %v3567
    %v3569 = vsel %vm3557, %v3436, %v3568
    %v3570 = vsel %vm3559, %v3437, %v3569
    %v3571 = vsel %vm3561, %v3438, %v3570
    %v3572 = vsel %vm3563, %v3439, %v3571
    %v3573 = vsel %vm3565, %v3440, %v3572
    %v3574 = vsel %vm3553, %v3442, %v3441
    %v3575 = vsel %vm3555, %v3443, %v3574
    %v3576 = vsel %vm3557, %v3444, %v3575
    %v3577 = vsel %vm3559, %v3445, %v3576
    %v3578 = vsel %vm3561, %v3446, %v3577
    %v3579 = vsel %vm3563, %v3447, %v3578
    %v3580 = vsel %vm3565, %v3448, %v3579
    %v3581 = vsel %vm3553, %v3450, %v3449
    %v3582 = vsel %vm3555, %v3451, %v3581
    %v3583 = vsel %vm3557, %v3452, %v3582
    %v3584 = vsel %vm3559, %v3453, %v3583
    %v3585 = vsel %vm3561, %v3454, %v3584
    %v3586 = vsel %vm3563, %v3455, %v3585
    %v3587 = vsel %vm3565, %v3456, %v3586
    %v3588 = vsel %vm3553, %v3458, %v3457
    %v3589 = vsel %vm3555, %v3459, %v3588
    %v3590 = vsel %vm3557, %v3460, %v3589
    %v3591 = vsel %vm3559, %v3461, %v3590
    %v3592 = vsel %vm3561, %v3462, %v3591
    %v3593 = vsel %vm3563, %v3463, %v3592
    %v3594 = vsel %vm3565, %v3464, %v3593
    %v3595 = vsel %vm3553, %v3466, %v3465
    %v3596 = vsel %vm3555, %v3467, %v3595
    %v3597 = vsel %vm3557, %v3468, %v3596
    %v3598 = vsel %vm3559, %v3469, %v3597
    %v3599 = vsel %vm3561, %v3470, %v3598
    %v3600 = vsel %vm3563, %v3471, %v3599
    %v3601 = vsel %vm3565, %v3472, %v3600
    %v3602 = vsel %vm3553, %v3474, %v3473
    %v3603 = vsel %vm3555, %v3475, %v3602
    %v3604 = vsel %vm3557, %v3476, %v3603
    %v3605 = vsel %vm3559, %v3477, %v3604
    %v3606 = vsel %vm3561, %v3478, %v3605
    %v3607 = vsel %vm3563, %v3479, %v3606
    %v3608 = vsel %vm3565, %v3480, %v3607
    %v3609 = vsel %vm3553, %v3482, %v3481
    %v3610 = vsel %vm3555, %v3483, %v3609
    %v3611 = vsel %vm3557, %v3484, %v3610
    %v3612 = vsel %vm3559, %v3485, %v3611
    %v3613 = vsel %vm3561, %v3486, %v3612
    %v3614 = vsel %vm3563, %v3487, %v3613
    %v3615 = vsel %vm3565, %v3488, %v3614
    %v3616 = vsel %vm3553, %v3490, %v3489
    %v3617 = vsel %vm3555, %v3491, %v3616
    %v3618 = vsel %vm3557, %v3492, %v3617
    %v3619 = vsel %vm3559, %v3493, %v3618
    %v3620 = vsel %vm3561, %v3494, %v3619
    %v3621 = vsel %vm3563, %v3495, %v3620
    %v3622 = vsel %vm3565, %v3496, %v3621
    %v3623 = vsel %vm3553, %v3498, %v3497
    %v3624 = vsel %vm3555, %v3499, %v3623
    %v3625 = vsel %vm3557, %v3500, %v3624
    %v3626 = vsel %vm3559, %v3501, %v3625
    %v3627 = vsel %vm3561, %v3502, %v3626
    %v3628 = vsel %vm3563, %v3503, %v3627
    %v3629 = vsel %vm3565, %v3504, %v3628
    %v3630 = vsel %vm3553, %v3506, %v3505
    %v3631 = vsel %vm3555, %v3507, %v3630
    %v3632 = vsel %vm3557, %v3508, %v3631
    %v3633 = vsel %vm3559, %v3509, %v3632
    %v3634 = vsel %vm3561, %v3510, %v3633
    %v3635 = vsel %vm3563, %v3511, %v3634
    %v3636 = vsel %vm3565, %v3512, %v3635
    %v3637 = vsel %vm3553, %v3514, %v3513
    %v3638 = vsel %vm3555, %v3515, %v3637
    %v3639 = vsel %vm3557, %v3516, %v3638
    %v3640 = vsel %vm3559, %v3517, %v3639
    %v3641 = vsel %vm3561, %v3518, %v3640
    %v3642 = vsel %vm3563, %v3519, %v3641
    %v3643 = vsel %vm3565, %v3520, %v3642
    %v3644 = vsel %vm3553, %v3522, %v3521
    %v3645 = vsel %vm3555, %v3523, %v3644
    %v3646 = vsel %vm3557, %v3524, %v3645
    %v3647 = vsel %vm3559, %v3525, %v3646
    %v3648 = vsel %vm3561, %v3526, %v3647
    %v3649 = vsel %vm3563, %v3527, %v3648
    %v3650 = vsel %vm3565, %v3528, %v3649
    %v3651 = vsel %vm3553, %v3530, %v3529
    %v3652 = vsel %vm3555, %v3531, %v3651
    %v3653 = vsel %vm3557, %v3532, %v3652
    %v3654 = vsel %vm3559, %v3533, %v3653
    %v3655 = vsel %vm3561, %v3534, %v3654
    %v3656 = vsel %vm3563, %v3535, %v3655
    %v3657 = vsel %vm3565, %v3536, %v3656
    %v3658 = vsel %vm3553, %v3538, %v3537
    %v3659 = vsel %vm3555, %v3539, %v3658
    %v3660 = vsel %vm3557, %v3540, %v3659
    %v3661 = vsel %vm3559, %v3541, %v3660
    %v3662 = vsel %vm3561, %v3542, %v3661
    %v3663 = vsel %vm3563, %v3543, %v3662
    %v3664 = vsel %vm3565, %v3544, %v3663
    %v3665 = vsel %vm3553, %v3546, %v3545
    %v3666 = vsel %vm3555, %v3547, %v3665
    %v3667 = vsel %vm3557, %v3548, %v3666
    %v3668 = vsel %vm3559, %v3549, %v3667
    %v3669 = vsel %vm3561, %v3550, %v3668
    %v3670 = vsel %vm3563, %v3551, %v3669
    %v3671 = vsel %vm3565, %v3552, %v3670
    %vm3688 = vcmask 64512
    %v3689 = vsel %vm3688, %v3566, 0.0
    %3690 = vadd.xlane.f32.xlu0 %v3689
    %v3691 = vpop.xlane.xlu0 %3690
    %v3692 = vsel %vm3688, %v3573, 0.0
    %3693 = vadd.xlane.f32.xlu0 %v3692
    %v3694 = vpop.xlane.xlu0 %3693
    %v3695 = vsel %vm3688, %v3580, 0.0
    %3696 = vadd.xlane.f32.xlu0 %v3695
    %v3697 = vpop.xlane.xlu0 %3696
    %v3698 = vsel %vm3688, %v3587, 0.0
    %3699 = vadd.xlane.f32.xlu0 %v3698
    %v3700 = vpop.xlane.xlu0 %3699
    %v3701 = vsel %vm3688, %v3594, 0.0
    %3702 = vadd.xlane.f32.xlu0 %v3701
    %v3703 = vpop.xlane.xlu0 %3702
    %v3704 = vsel %vm3688, %v3601, 0.0
    %3705 = vadd.xlane.f32.xlu0 %v3704
    %v3706 = vpop.xlane.xlu0 %3705
    %v3707 = vsel %vm3688, %v3608, 0.0
    %3708 = vadd.xlane.f32.xlu0 %v3707
    %v3709 = vpop.xlane.xlu0 %3708
    %v3710 = vsel %vm3688, %v3615, 0.0
    %3711 = vadd.xlane.f32.xlu0 %v3710
    %v3712 = vpop.xlane.xlu0 %3711
    %v3713 = vsel %vm3688, %v3622, 0.0
    %3714 = vadd.xlane.f32.xlu0 %v3713
    %v3715 = vpop.xlane.xlu0 %3714
    %v3716 = vsel %vm3688, %v3629, 0.0
    %3717 = vadd.xlane.f32.xlu0 %v3716
    %v3718 = vpop.xlane.xlu0 %3717
    %v3719 = vsel %vm3688, %v3636, 0.0
    %3720 = vadd.xlane.f32.xlu0 %v3719
    %v3721 = vpop.xlane.xlu0 %3720
    %v3722 = vsel %vm3688, %v3643, 0.0
    %3723 = vadd.xlane.f32.xlu0 %v3722
    %v3724 = vpop.xlane.xlu0 %3723
    %v3725 = vsel %vm3688, %v3650, 0.0
    %3726 = vadd.xlane.f32.xlu0 %v3725
    %v3727 = vpop.xlane.xlu0 %3726
    %v3728 = vsel %vm3688, %v3657, 0.0
    %3729 = vadd.xlane.f32.xlu0 %v3728
    %v3730 = vpop.xlane.xlu0 %3729
    %v3731 = vsel %vm3688, %v3664, 0.0
    %3732 = vadd.xlane.f32.xlu0 %v3731
    %v3733 = vpop.xlane.xlu0 %3732
    %v3734 = vsel %vm3688, %v3671, 0.0
    %3735 = vadd.xlane.f32.xlu0 %v3734
    %v3736 = vpop.xlane.xlu0 %3735
    %v3753 = vperm.slane %v3691, %v3424
    %v3754 = vadd.s32 %v3424, 4294967288
    %v3755 = vperm.slane %v3694, %v3754
    %vm3756 = vcmask 130112
    %v3757 = vsel %vm3756, %v3755, %v3753
    %v3758 = vadd.s32 %v3424, 4294967280
    %v3759 = vperm.slane %v3697, %v3758
    %vm3760 = vcmask 195712
    %v3761 = vsel %vm3760, %v3759, %v3757
    %v3762 = vadd.s32 %v3424, 4294967272
    %v3763 = vperm.slane %v3700, %v3762
    %vm3764 = vcmask 261312
    %v3765 = vsel %vm3764, %v3763, %v3761
    %v3766 = vadd.s32 %v3424, 4294967264
    %v3767 = vperm.slane %v3703, %v3766
    %vm3768 = vcmask 326912
    %v3769 = vsel %vm3768, %v3767, %v3765
    %v3770 = vadd.s32 %v3424, 4294967256
    %v3771 = vperm.slane %v3706, %v3770
    %vm3772 = vcmask 392512
    %v3773 = vsel %vm3772, %v3771, %v3769
    %v3774 = vadd.s32 %v3424, 4294967248
    %v3775 = vperm.slane %v3709, %v3774
    %vm3776 = vcmask 458112
    %v3777 = vsel %vm3776, %v3775, %v3773
    %v3778 = vadd.s32 %v3424, 4294967240
    %v3779 = vperm.slane %v3712, %v3778
    %vm3780 = vcmask 523712
    %v3781 = vsel %vm3780, %v3779, %v3777
    %v3782 = vadd.s32 %v3424, 4294967232
    %v3783 = vperm.slane %v3715, %v3782
    %vm3784 = vcmask 589312
    %v3785 = vsel %vm3784, %v3783, %v3781
    %v3786 = vadd.s32 %v3424, 4294967224
    %v3787 = vperm.slane %v3718, %v3786
    %vm3788 = vcmask 654912
    %v3789 = vsel %vm3788, %v3787, %v3785
    %v3790 = vadd.s32 %v3424, 4294967216
    %v3791 = vperm.slane %v3721, %v3790
    %vm3792 = vcmask 720512
    %v3793 = vsel %vm3792, %v3791, %v3789
    %v3794 = vadd.s32 %v3424, 4294967208
    %v3795 = vperm.slane %v3724, %v3794
    %vm3796 = vcmask 786112
    %v3797 = vsel %vm3796, %v3795, %v3793
    %v3798 = vadd.s32 %v3424, 4294967200
    %v3799 = vperm.slane %v3727, %v3798
    %vm3800 = vcmask 851712
    %v3801 = vsel %vm3800, %v3799, %v3797
    %v3802 = vadd.s32 %v3424, 4294967192
    %v3803 = vperm.slane %v3730, %v3802
    %vm3804 = vcmask 917312
    %v3805 = vsel %vm3804, %v3803, %v3801
    %v3806 = vadd.s32 %v3424, 4294967184
    %v3807 = vperm.slane %v3733, %v3806
    %vm3808 = vcmask 982912
    %v3809 = vsel %vm3808, %v3807, %v3805
    %v3810 = vadd.s32 %v3424, 4294967176
    %v3811 = vperm.slane %v3736, %v3810
    %vm3812 = vcmask 1048512
    %v3813 = vsel %vm3812, %v3811, %v3809
    %3815 = vst [vmem:[#allocation3] sm:$0x1] %v3813
    // Predicated region
    $region30: #{tpu_custom_call.1} parent=1 // pred_check
      _
    $region31: #{tpu_custom_call.1} parent=1 // pred_check_branch
      %3817 = sbr.rel (0) target = $region33
    $region32: #{tpu_custom_call.1} parent=1 // pred_region
      %3819 = vsyncadd [#allocation4], 0
      %s3821 = sshll.u32 [#allocation3], 4
      %s3822 = int_to_ptr.vmem [resolvable:$true] %s3821
      %s3823 = sshll.u32 %s7, 4
      %s3824 = int_to_ptr.hbm [resolvable:$true] %s3823
      %3826 = dma.vmem_to_hbm [thread:$0]  %s3822, 16, %s3824, [#allocation4]
    $region33: #{tpu_custom_call.1} parent=1 // pred_fallthru
      _
    // Predicated region
    $region34: #{tpu_custom_call.1} parent=1 // pred_check
      _
    $region35: #{tpu_custom_call.1} parent=1 // pred_check_branch
      %3828 = sbr.rel (0) target = $region37
    $region36: #{tpu_custom_call.1} parent=1 // pred_region
      %3830 = dma.done [#allocation4], 16
    $region37: #{tpu_custom_call.1} parent=1 // pred_fallthru
      _
    %3831 = vsyncpa [#allocation4], 1

</llo_original>
